<compile_context>
chip_gen: v6e
topology: v6e:2x2x1
jax: 0.10.0
libtpu: 0.0.40
codegen_flags: <defaults>
</compile_context>

<pallas_src>
import functools

import jax
import jax.numpy as jnp
import numpy as np
from jax import lax
from jax.experimental import pallas as pl
from jax.experimental.pallas import tpu as pltpu

EPS = 1e-5
_LANE = 128


def _round_up(x, m):
    return (x + m - 1) // m * m


# --------------------------- in-kernel helpers --------------------------------

def _conv3x3_fused(x_f32, wcat_ref, H):
    """3x3 / stride-1 / pad-1 conv on a stack of B images packed as
    (R = B*H, W*Cin) rows.  The 3 kernel-row (ky) taps are fused into ONE MXU
    matmul: the row-shifted copies are concatenated along K and multiplied by
    a single (3*W*Cin, W*Cout) block-banded weight built in the wrapper.
    Image borders (and image-to-image row bleed from rolling the stacked
    block) are zeroed with masks built once from a single iota.
    """
    R = x_f32.shape[0]
    y = lax.broadcasted_iota(jnp.int32, x_f32.shape, 0) % H        # image-local row
    up = jnp.where(y >= 1, pltpu.roll(x_f32, shift=1, axis=0), 0.0)        # x[r-1]
    dn = jnp.where(y <= H - 2, pltpu.roll(x_f32, shift=R - 1, axis=0), 0.0)  # x[r+1]
    xcat = jnp.concatenate([up, x_f32, dn], axis=-1).astype(jnp.bfloat16)
    return jnp.dot(xcat, wcat_ref[...], preferred_element_type=jnp.float32)


def _stack_rows(rows):
    """Stack (1, L) row values into an (n, L) value without tpu.concatenate
    (select over a row-index iota) so the stats leave the kernel as ONE store."""
    n, L = len(rows), rows[0].shape[-1]
    r = lax.broadcasted_iota(jnp.int32, (n, L), 0)
    out = rows[-1]
    for i in range(n - 2, -1, -1):
        out = jnp.where(r == i, rows[i], out)
    return out


def _sum_sumsq(a):
    return [jnp.sum(a, axis=0, keepdims=True),
            jnp.sum(a * a, axis=0, keepdims=True)]


# -------------------------------- kernels --------------------------------------

def _k1_conv1(x_ref, w1_ref, a1_ref, st_ref, *, H):
    """Pass 1 (identity shortcut): conv1 -> bf16 a1 + f32 BN1 partial stats."""
    acc = _conv3x3_fused(x_ref[...], w1_ref, H)
    a1_ref[...] = acc.astype(jnp.bfloat16)
    st_ref[...] = _stack_rows(_sum_sumsq(acc))


def _k1_conv1_proj(x_ref, w1_ref, ws_ref, a1_ref, sp_ref, st_ref, *, H):
    """Pass 1 (projection): conv1 + 1x1 projection -> bf16 a1, sp + f32 stats."""
    x = x_ref[...]
    acc = _conv3x3_fused(x, w1_ref, H)
    a1_ref[...] = acc.astype(jnp.bfloat16)
    sp = jnp.dot(x.astype(jnp.bfloat16), ws_ref[...],
                 preferred_element_type=jnp.float32)
    sp_ref[...] = sp.astype(jnp.bfloat16)
    st_ref[...] = _stack_rows(_sum_sumsq(acc) + _sum_sumsq(sp))


def _k2_bn1_conv2(a1_ref, sc1_ref, sh1_ref, w2_ref, a2_ref, st_ref, *, H):
    """Pass 2: bn1 (fused scale/shift) + relu, conv2 -> bf16 a2 + f32 stats."""
    h = jnp.maximum(a1_ref[...].astype(jnp.float32) * sc1_ref[...] + sh1_ref[...],
                    0.0)
    acc = _conv3x3_fused(h, w2_ref, H)
    a2_ref[...] = acc.astype(jnp.bfloat16)
    st_ref[...] = _stack_rows(_sum_sumsq(acc))


def _k3_proj(a2_ref, sc2_ref, sh2_ref, sp_ref, scs_ref, shs_ref, out_ref):
    """Pass 3 (projection): bn2(a2) + bn_s(sp) + relu."""
    out = (a2_ref[...].astype(jnp.float32) * sc2_ref[...] + sh2_ref[...]
           + sp_ref[...].astype(jnp.float32) * scs_ref[...] + shs_ref[...])
    out_ref[...] = jnp.maximum(out, 0.0)


def _k3_identity(a2_ref, sc2_ref, sh2_ref, x_ref, out_ref):
    """Pass 3 (identity): bn2(a2) + x + relu (no shortcut BN operands)."""
    out = (a2_ref[...].astype(jnp.float32) * sc2_ref[...] + sh2_ref[...]
           + x_ref[...])
    out_ref[...] = jnp.maximum(out, 0.0)


# ------------------------------ wrapper helpers ---------------------------------

def _banded_conv3x3(w_oihw, W, k_pad):
    """(Cout,Cin,3,3) OIHW -> (3*k_pad, W*Cout) fused block-banded weight.

    dx taps + channel contraction are folded into the K axis; the 3 ky taps are
    stacked along K so the whole conv is ONE matmul against the ky-concatenated
    row-shifted activations.  k_pad >= W*Cin adds zero rows for lane-padded inputs.

    TODO(synk): at real ResNet widths (e.g. W=56, C>=64) this banded weight is
    only 3/W dense and exceeds v7x's 64 MiB VMEM; switch to a lane=C layout with
    per-tap (row-tile, Cin)x(Cin, Cout) matmuls, or tile the band along W.
    """
    Cout, Cin = w_oihw.shape[0], w_oihw.shape[1]
    a = jnp.arange(W)
    # sel[kx, x_in, x_out] = 1 where x_in == x_out + kx - 1 (zero padding in x)
    sel = (a[None, :, None] == a[None, None, :]
           + jnp.arange(3)[:, None, None] - 1).astype(jnp.float32)
    b = jnp.einsum('oiyx,xab->yaibo', w_oihw.astype(jnp.float32), sel)
    b = b.reshape(3, W * Cin, W * Cout)
    if k_pad != W * Cin:
        b = jnp.pad(b, ((0, 0), (0, k_pad - W * Cin), (0, 0)))
    return b.reshape(3 * k_pad, W * Cout)


def _banded_conv1x1(w_oi11, W, k_pad):
    """(Cout,Cin,1,1) -> (k_pad, W*Cout) block-diagonal matmul weight."""
    Cout, Cin = w_oi11.shape[0], w_oi11.shape[1]
    ws = w_oi11.reshape(Cout, Cin).astype(jnp.float32)
    b = jnp.einsum('oi,ab->aibo', ws, jnp.eye(W, dtype=jnp.float32))
    b = b.reshape(W * Cin, W * Cout)
    if k_pad != W * Cin:
        b = jnp.pad(b, ((0, k_pad - W * Cin), (0, 0)))
    return b


def _bn_scale_shift(stats, gamma, beta, W, C, count):
    """Finalize cross-tile BN stats -> packed (1, W*C) fused scale & shift."""
    s = stats.reshape(-1, 2, W, C).sum(axis=(0, 2))          # (2, C), tiny
    mean = s[0] / count
    var = s[1] / count - mean * mean                          # biased variance
    # TODO(synk): E[x^2]-mean^2 in f32 can cancel catastrophically at real
    # ResNet scales; switch to a shifted / two-pass reduction there.
    scale = gamma * lax.rsqrt(var + EPS)
    shift = beta - mean * scale
    return (jnp.tile(scale, W).reshape(1, W * C),
            jnp.tile(shift, W).reshape(1, W * C))


def _pick_batch_block(N, H, max_wc):
    """Images per grid step: aim for >=256 matmul rows (MXU fill) while keeping
    one f32 tile ~<=4 MiB so double-buffered tiles fit v7x's 64 MiB VMEM and
    leave headroom on v5e/v6e's 128 MiB."""
    target_rows, tile_budget = 256, 4 * 1024 * 1024
    best = 1
    for b in range(1, N + 1):
        if N % b:
            continue
        if (b * H) % 16 and b != N:      # keep bf16/f32 sublane tiling legal
            continue
        if b * H * max_wc * 4 > tile_budget:
            break
        best = b
        if b * H >= target_rows:
            break
    return best


# --------------------------------- forward --------------------------------------

@functools.partial(jax.jit, static_argnames=("stride",))
def basic_block_forward(x_nchw, params, stride=1):
    """ResNet BasicBlock forward (training-mode BN).  NCHW in / NCHW out."""
    if stride != 1:
        # TODO(synk): strided (downsampling) conv3x3 / conv1x1 path not implemented.
        raise NotImplementedError("stride != 1 not supported by this kernel")

    N, Cin, H, W = x_nchw.shape
    Cout = params["w1"].shape[0]
    has_proj = (Cin != Cout)
    WCi, WCo = W * Cin, W * Cout
    WCiP = _round_up(WCi, _LANE)    # lane-pad -> in-kernel ky concat stays aligned
    M = N * H * W                   # per-channel BN element count

    # TODO(synk): the NCHW <-> packed-(N*H, W*C) relayout below is a full HBM
    # round trip; chained BasicBlocks should pass the packed layout straight
    # through instead of converting at every block boundary.
    x = jnp.transpose(x_nchw, (0, 2, 3, 1)).astype(jnp.float32)    # NCHW -> NHWC
    x2 = x.reshape(N * H, WCi)                                     # lane axis = W*C
    x2p = jnp.pad(x2, ((0, 0), (0, WCiP - WCi))) if WCiP != WCi else x2

    B = _pick_batch_block(N, H, 3 * max(WCiP, WCo))
    G = N // B
    BR = B * H                                                     # rows per matmul

    w1b = _banded_conv3x3(params["w1"], W, WCiP).astype(jnp.bfloat16)  # (3*WCiP, WCo)
    w2b = _banded_conv3x3(params["w2"], W, WCo).astype(jnp.bfloat16)   # (3*WCo, WCo)

    cparams = pltpu.CompilerParams(
        dimension_semantics=("parallel",),
        vmem_limit_bytes=48 * 1024 * 1024)   # fits v7x's 64 MiB, ample on v5e/v6e

    def blk(wc):
        return pl.BlockSpec((BR, wc), lambda g: (g, 0))

    def full2(shape):
        return pl.BlockSpec(shape, lambda g: (0, 0))

    row_spec = pl.BlockSpec((1, WCo), lambda g: (0, 0))

    def st_spec(n_st):
        return pl.BlockSpec((None, n_st, WCo), lambda g: (g, 0, 0))

    # ------------- pass 1: conv1 (+ projection shortcut) + partial stats ----------
    if has_proj:
        wsb = _banded_conv1x1(params["ws"], W, WCiP).astype(jnp.bfloat16)
        a1, sp, st1 = pl.pallas_call(
            functools.partial(_k1_conv1_proj, H=H),
            grid=(G,),
            in_specs=[blk(WCiP), full2((3 * WCiP, WCo)), full2((WCiP, WCo))],
            out_specs=(blk(WCo), blk(WCo), st_spec(4)),
            out_shape=(jax.ShapeDtypeStruct((N * H, WCo), jnp.bfloat16),
                       jax.ShapeDtypeStruct((N * H, WCo), jnp.bfloat16),
                       jax.ShapeDtypeStruct((G, 4, WCo), jnp.float32)),
            compiler_params=cparams,
            cost_estimate=pl.CostEstimate(
                flops=2 * M * Cout * (9 * Cin + Cin), transcendentals=0,
                bytes_accessed=4 * M * Cin + 4 * M * Cout),
        )(x2p, w1b, wsb)
        scs, shs = _bn_scale_shift(st1[:, 2:4], params["gammas"], params["betas"],
                                   W, Cout, M)
        st1 = st1[:, 0:2]
    else:
        a1, st1 = pl.pallas_call(
            functools.partial(_k1_conv1, H=H),
            grid=(G,),
            in_specs=[blk(WCiP), full2((3 * WCiP, WCo))],
            out_specs=(blk(WCo), st_spec(2)),
            out_shape=(jax.ShapeDtypeStruct((N * H, WCo), jnp.bfloat16),
                       jax.ShapeDtypeStruct((G, 2, WCo), jnp.float32)),
            compiler_params=cparams,
            cost_estimate=pl.CostEstimate(
                flops=2 * M * 9 * Cin * Cout, transcendentals=0,
                bytes_accessed=4 * M * Cin + 2 * M * Cout),
        )(x2p, w1b)

    sc1, sh1 = _bn_scale_shift(st1, params["gamma1"], params["beta1"], W, Cout, M)

    # --------------------- pass 2: bn1 + relu, conv2 + stats ----------------------
    a2, st2 = pl.pallas_call(
        functools.partial(_k2_bn1_conv2, H=H),
        grid=(G,),
        in_specs=[blk(WCo), row_spec, row_spec, full2((3 * WCo, WCo))],
        out_specs=(blk(WCo), st_spec(2)),
        out_shape=(jax.ShapeDtypeStruct((N * H, WCo), jnp.bfloat16),
                   jax.ShapeDtypeStruct((G, 2, WCo), jnp.float32)),
        compiler_params=cparams,
        cost_estimate=pl.CostEstimate(
            flops=2 * M * 9 * Cout * Cout, transcendentals=0,
            bytes_accessed=4 * M * Cout),
    )(a1, sc1, sh1, w2b)

    sc2, sh2 = _bn_scale_shift(st2, params["gamma2"], params["beta2"], W, Cout, M)

    # --------------------- pass 3: bn2 + shortcut + relu --------------------------
    if has_proj:
        out2d = pl.pallas_call(
            _k3_proj,
            grid=(G,),
            in_specs=[blk(WCo), row_spec, row_spec, blk(WCo), row_spec, row_spec],
            out_specs=blk(WCo),
            out_shape=jax.ShapeDtypeStruct((N * H, WCo), jnp.float32),
            compiler_params=cparams,
            cost_estimate=pl.CostEstimate(flops=8 * M * Cout, transcendentals=0,
                                          bytes_accessed=8 * M * Cout),
        )(a2, sc2, sh2, sp, scs, shs)
    else:
        out2d = pl.pallas_call(
            _k3_identity,
            grid=(G,),
            in_specs=[blk(WCo), row_spec, row_spec, blk(WCo)],
            out_specs=blk(WCo),
            out_shape=jax.ShapeDtypeStruct((N * H, WCo), jnp.float32),
            compiler_params=cparams,
            cost_estimate=pl.CostEstimate(flops=4 * M * Cout, transcendentals=0,
                                          bytes_accessed=10 * M * Cout),
        )(a2, sc2, sh2, x2)

    out = out2d.reshape(N, H, W, Cout)
    return jnp.transpose(out, (0, 3, 1, 2))                        # NHWC -> NCHW


# ----------------------- pure-JAX reference (for check) --------------------------

def basic_block_reference(x, params):
    def bn(y, g, b):
        mu = jnp.mean(y, axis=(0, 2, 3), keepdims=True)
        var = jnp.mean((y - mu) ** 2, axis=(0, 2, 3), keepdims=True)
        return (y - mu) / jnp.sqrt(var + EPS) * g.reshape(1, -1, 1, 1) \
            + b.reshape(1, -1, 1, 1)

    def conv(y, w, pad):
        return lax.conv_general_dilated(
            y, w, (1, 1), [(pad, pad), (pad, pad)],
            dimension_numbers=("NCHW", "OIHW", "NCHW"))

    out = jax.nn.relu(bn(conv(x, params["w1"], 1), params["gamma1"], params["beta1"]))
    out = bn(conv(out, params["w2"], 1), params["gamma2"], params["beta2"])
    if "ws" in params:
        sc = bn(conv(x, params["ws"], 0), params["gammas"], params["betas"])
    else:
        sc = x
    return jax.nn.relu(out + sc)


# ------------------------------------ main ----------------------------------------

def _make_params(key, in_planes, planes, with_projection):
    ks = jax.random.split(key, 9)
    p = {
        "w1": 0.2 * jax.random.normal(ks[0], (planes, in_planes, 3, 3), jnp.float32),
        "gamma1": 1.0 + 0.1 * jax.random.normal(ks[1], (planes,), jnp.float32),
        "beta1": 0.1 * jax.random.normal(ks[2], (planes,), jnp.float32),
        "w2": 0.2 * jax.random.normal(ks[3], (planes, planes, 3, 3), jnp.float32),
        "gamma2": 1.0 + 0.1 * jax.random.normal(ks[4], (planes,), jnp.float32),
        "beta2": 0.1 * jax.random.normal(ks[5], (planes,), jnp.float32),
    }
    if with_projection:
        p["ws"] = 0.2 * jax.random.normal(ks[6], (planes, in_planes, 1, 1), jnp.float32)
        p["gammas"] = 1.0 + 0.1 * jax.random.normal(ks[7], (planes,), jnp.float32)
        p["betas"] = 0.1 * jax.random.normal(ks[8], (planes,), jnp.float32)
    return p


if __name__ == "__main__":
    key = jax.random.PRNGKey(0)
    k_proj, k_id, k_x1, k_x2 = jax.random.split(key, 4)
    N, H, W = 2, 16, 16

    # Case 1: in_planes != planes -> projection shortcut (1x1 conv + bn)
    in_planes, planes = 4, 8
    params_proj = _make_params(k_proj, in_planes, planes, with_projection=True)
    x1 = jax.random.normal(k_x1, (N, in_planes, H, W), jnp.float32)
    out1 = jax.block_until_ready(basic_block_forward(x1, params_proj))
    ref1 = basic_block_reference(x1, params_proj)
    # bf16 MXU operands + bf16 intermediates (f32 accumulation/stats)
    # => relaxed tolerance vs the f32 reference.
    np.testing.assert_allclose(np.asarray(out1), np.asarray(ref1),
                               rtol=5e-2, atol=5e-2)

    # Case 2: in_planes == planes -> identity shortcut
    params_id = _make_params(k_id, planes, planes, with_projection=False)
    x2 = jax.random.normal(k_x2, (N, planes, H, W), jnp.float32)
    out2 = jax.block_until_ready(basic_block_forward(x2, params_id))
    ref2 = basic_block_reference(x2, params_id)
    np.testing.assert_allclose(np.asarray(out2), np.asarray(ref2),
                               rtol=5e-2, atol=5e-2)

    print("KERNEL_OK")
</pallas_src>

<mosaic_0001>
module attributes {stable_mosaic.version = 11 : i64} {
  func.func @_k1_conv1_proj(%arg0: i32, %arg1: memref<32x128xf32, #tpu.memory_space<vmem>>, %arg2: memref<384x128xbf16, #tpu.memory_space<vmem>>, %arg3: memref<128x128xbf16, #tpu.memory_space<vmem>>, %arg4: memref<32x128xbf16, #tpu.memory_space<vmem>>, %arg5: memref<32x128xbf16, #tpu.memory_space<vmem>>, %arg6: memref<1x4x128xf32, #tpu.memory_space<vmem>>) attributes {dimension_semantics = [#tpu.dimension_semantics<parallel>], iteration_bounds = array<i64: 1>, scalar_prefetch = 0 : i64, scratch_operands = 0 : i64, tpu.core_type = #tpu.core_type<tc>, window_params = [{transform_indices = @transform_0, window_bounds = array<i64: 32, 128>}, {pipeline_mode = #tpu.pipeline_mode<synchronous>, transform_indices = @transform_1, window_bounds = array<i64: 384, 128>}, {pipeline_mode = #tpu.pipeline_mode<synchronous>, transform_indices = @transform_2, window_bounds = array<i64: 128, 128>}, {transform_indices = @transform_3, window_bounds = array<i64: 32, 128>}, {transform_indices = @transform_4, window_bounds = array<i64: 32, 128>}, {transform_indices = @transform_5, window_bounds = array<i64: 1, 4, 128>}]} {
    %c0 = arith.constant 0 : index
    %c0_0 = arith.constant 0 : index
    %0 = vector.load %arg1[%c0, %c0_0] : memref<32x128xf32, #tpu.memory_space<vmem>>, vector<32x128xf32>
    %1 = tpu.iota {dimensions = array<i32: 0>} : vector<32x128xi32>
    %c16_i32 = arith.constant 16 : i32
    %c0_i32 = arith.constant 0 : i32
    %2 = arith.cmpi eq, %c16_i32, %c0_i32 : i32
    %c1_i32 = arith.constant 1 : i32
    %3 = arith.select %2, %c1_i32, %c16_i32 : i32
    %4 = vector.broadcast %3 : i32 to vector<32x128xi32>
    %5 = arith.remsi %1, %4 : vector<32x128xi32>
    %c0_i32_1 = arith.constant 0 : i32
    %6 = vector.broadcast %c0_i32_1 : i32 to vector<32x128xi32>
    %7 = arith.cmpi ne, %5, %6 : vector<32x128xi32>
    %c0_i32_2 = arith.constant 0 : i32
    %8 = vector.broadcast %c0_i32_2 : i32 to vector<32x128xi32>
    %9 = arith.cmpi slt, %5, %8 : vector<32x128xi32>
    %c0_i32_3 = arith.constant 0 : i32
    %10 = arith.cmpi slt, %3, %c0_i32_3 : i32
    %11 = vector.broadcast %10 : i1 to vector<32x128xi1>
    %12 = vector.broadcast %11 : vector<32x128xi1> to vector<32x128xi1>
    %13 = arith.xori %9, %12 : vector<32x128xi1>
    %14 = arith.andi %13, %7 : vector<32x128xi1>
    %15 = vector.broadcast %3 : i32 to vector<32x128xi32>
    %16 = arith.addi %5, %15 : vector<32x128xi32>
    %17 = arith.select %14, %16, %5 : vector<32x128xi1>, vector<32x128xi32>
    %c1_i32_4 = arith.constant 1 : i32
    %18 = vector.broadcast %c1_i32_4 : i32 to vector<32x128xi32>
    %19 = arith.cmpi sge, %17, %18 : vector<32x128xi32>
    %c1_i32_5 = arith.constant 1 : i32
    %20 = tpu.dynamic_rotate %0 by %c1_i32_5 dim 0 : vector<32x128xf32>, i32 -> vector<32x128xf32>
    %cst = arith.constant 0.000000e+00 : f32
    %21 = vector.broadcast %cst : f32 to vector<32x128xf32>
    %22 = arith.select %19, %20, %21 : vector<32x128xi1>, vector<32x128xf32>
    %c14_i32 = arith.constant 14 : i32
    %23 = vector.broadcast %c14_i32 : i32 to vector<32x128xi32>
    %24 = arith.cmpi sle, %17, %23 : vector<32x128xi32>
    %c31_i32 = arith.constant 31 : i32
    %25 = tpu.dynamic_rotate %0 by %c31_i32 dim 0 : vector<32x128xf32>, i32 -> vector<32x128xf32>
    %cst_6 = arith.constant 0.000000e+00 : f32
    %26 = vector.broadcast %cst_6 : f32 to vector<32x128xf32>
    %27 = arith.select %24, %25, %26 : vector<32x128xi1>, vector<32x128xf32>
    %28 = tpu.concatenate %22, %0, %27 in 1 : vector<32x128xf32>, vector<32x128xf32>, vector<32x128xf32> -> vector<32x384xf32>
    %29 = arith.truncf %28 : vector<32x384xf32> to vector<32x384xbf16>
    %c0_7 = arith.constant 0 : index
    %c0_8 = arith.constant 0 : index
    %30 = vector.load %arg2[%c0_7, %c0_8] : memref<384x128xbf16, #tpu.memory_space<vmem>>, vector<384x128xbf16>
    %cst_9 = arith.constant dense<0.000000e+00> : vector<32x128xf32>
    %31 = tpu.matmul %29, %30, %cst_9 {dimension_numbers = #tpu.dot_dimension_numbers<[1], [0], [0], [1], [0, 0, 1, 1], [], []>} : vector<32x384xbf16>, vector<384x128xbf16>, vector<32x128xf32> -> vector<32x128xf32>
    %32 = arith.truncf %31 : vector<32x128xf32> to vector<32x128xbf16>
    %c0_10 = arith.constant 0 : index
    %c0_11 = arith.constant 0 : index
    %33 = vector.load %arg4[%c0_10, %c0_11] : memref<32x128xbf16, #tpu.memory_space<vmem>>, vector<32x128xbf16>
    tpu.vector_store %arg4[%c0_10, %c0_11], %32 {strides = array<i32>} : memref<32x128xbf16, #tpu.memory_space<vmem>>, vector<32x128xbf16>,
    %34 = arith.truncf %0 : vector<32x128xf32> to vector<32x128xbf16>
    %c0_12 = arith.constant 0 : index
    %c0_13 = arith.constant 0 : index
    %35 = vector.load %arg3[%c0_12, %c0_13] : memref<128x128xbf16, #tpu.memory_space<vmem>>, vector<128x128xbf16>
    %cst_14 = arith.constant dense<0.000000e+00> : vector<32x128xf32>
    %36 = tpu.matmul %34, %35, %cst_14 {dimension_numbers = #tpu.dot_dimension_numbers<[1], [0], [0], [1], [0, 0, 1, 1], [], []>} : vector<32x128xbf16>, vector<128x128xbf16>, vector<32x128xf32> -> vector<32x128xf32>
    %37 = arith.truncf %36 : vector<32x128xf32> to vector<32x128xbf16>
    %c0_15 = arith.constant 0 : index
    %c0_16 = arith.constant 0 : index
    %38 = vector.load %arg5[%c0_15, %c0_16] : memref<32x128xbf16, #tpu.memory_space<vmem>>, vector<32x128xbf16>
    tpu.vector_store %arg5[%c0_15, %c0_16], %37 {strides = array<i32>} : memref<32x128xbf16, #tpu.memory_space<vmem>>, vector<32x128xbf16>,
    %cst_17 = arith.constant dense<0.000000e+00> : vector<128xf32>
    %39 = vector.multi_reduction <add>, %31, %cst_17 [0] : vector<32x128xf32> to vector<128xf32>
    %40 = vector.shape_cast %39 : vector<128xf32> to vector<1x128xf32>
    %41 = arith.mulf %31, %31 : vector<32x128xf32>
    %cst_18 = arith.constant dense<0.000000e+00> : vector<128xf32>
    %42 = vector.multi_reduction <add>, %41, %cst_18 [0] : vector<32x128xf32> to vector<128xf32>
    %43 = vector.shape_cast %42 : vector<128xf32> to vector<1x128xf32>
    %cst_19 = arith.constant dense<0.000000e+00> : vector<128xf32>
    %44 = vector.multi_reduction <add>, %36, %cst_19 [0] : vector<32x128xf32> to vector<128xf32>
    %45 = vector.shape_cast %44 : vector<128xf32> to vector<1x128xf32>
    %46 = arith.mulf %36, %36 : vector<32x128xf32>
    %cst_20 = arith.constant dense<0.000000e+00> : vector<128xf32>
    %47 = vector.multi_reduction <add>, %46, %cst_20 [0] : vector<32x128xf32> to vector<128xf32>
    %48 = vector.shape_cast %47 : vector<128xf32> to vector<1x128xf32>
    %49 = tpu.iota {dimensions = array<i32: 0>} : vector<4x128xi32>
    %c2_i32 = arith.constant 2 : i32
    %50 = vector.broadcast %c2_i32 : i32 to vector<4x128xi32>
    %51 = arith.cmpi eq, %49, %50 : vector<4x128xi32>
    %52 = vector.shape_cast %45 : vector<1x128xf32> to vector<1x128xf32>
    %53 = vector.broadcast %52 : vector<1x128xf32> to vector<4x128xf32>
    %54 = vector.shape_cast %48 : vector<1x128xf32> to vector<1x128xf32>
    %55 = vector.broadcast %54 : vector<1x128xf32> to vector<4x128xf32>
    %56 = arith.select %51, %53, %55 : vector<4x128xi1>, vector<4x128xf32>
    %c1_i32_21 = arith.constant 1 : i32
    %57 = vector.broadcast %c1_i32_21 : i32 to vector<4x128xi32>
    %58 = arith.cmpi eq, %49, %57 : vector<4x128xi32>
    %59 = vector.shape_cast %43 : vector<1x128xf32> to vector<1x128xf32>
    %60 = vector.broadcast %59 : vector<1x128xf32> to vector<4x128xf32>
    %61 = arith.select %58, %60, %56 : vector<4x128xi1>, vector<4x128xf32>
    %c0_i32_22 = arith.constant 0 : i32
    %62 = vector.broadcast %c0_i32_22 : i32 to vector<4x128xi32>
    %63 = arith.cmpi eq, %49, %62 : vector<4x128xi32>
    %64 = vector.shape_cast %40 : vector<1x128xf32> to vector<1x128xf32>
    %65 = vector.broadcast %64 : vector<1x128xf32> to vector<4x128xf32>
    %66 = arith.select %63, %65, %61 : vector<4x128xi1>, vector<4x128xf32>
    %c0_23 = arith.constant 0 : index
    %c0_24 = arith.constant 0 : index
    %c0_25 = arith.constant 0 : index
    %67 = vector.load %arg6[%c0_23, %c0_24, %c0_25] : memref<1x4x128xf32, #tpu.memory_space<vmem>>, vector<1x4x128xf32>
    %68 = vector.shape_cast %67 : vector<1x4x128xf32> to vector<4x128xf32>
    %69 = vector.shape_cast %66 : vector<4x128xf32> to vector<1x4x128xf32>
    tpu.vector_store %arg6[%c0_23, %c0_24, %c0_25], %69 {strides = array<i32>} : memref<1x4x128xf32, #tpu.memory_space<vmem>>, vector<1x4x128xf32>,
    return
  }
  func.func @transform_0(%arg0: i32) -> (i32, i32) {
    %c0_i32 = arith.constant 0 : i32
    %c0_i32_0 = arith.constant 0 : i32
    return %arg0, %c0_i32 : i32, i32
  }
  func.func @transform_1(%arg0: i32) -> (i32, i32) {
    %c0_i32 = arith.constant 0 : i32
    %c0_i32_0 = arith.constant 0 : i32
    %c0_i32_1 = arith.constant 0 : i32
    return %c0_i32, %c0_i32_0 : i32, i32
  }
  func.func @transform_2(%arg0: i32) -> (i32, i32) {
    %c0_i32 = arith.constant 0 : i32
    %c0_i32_0 = arith.constant 0 : i32
    %c0_i32_1 = arith.constant 0 : i32
    return %c0_i32, %c0_i32_0 : i32, i32
  }
  func.func @transform_3(%arg0: i32) -> (i32, i32) {
    %c0_i32 = arith.constant 0 : i32
    %c0_i32_0 = arith.constant 0 : i32
    return %arg0, %c0_i32 : i32, i32
  }
  func.func @transform_4(%arg0: i32) -> (i32, i32) {
    %c0_i32 = arith.constant 0 : i32
    %c0_i32_0 = arith.constant 0 : i32
    return %arg0, %c0_i32 : i32, i32
  }
  func.func @transform_5(%arg0: i32) -> (i32, i32, i32) {
    %c0_i32 = arith.constant 0 : i32
    %c0_i32_0 = arith.constant 0 : i32
    %c0_i32_1 = arith.constant 0 : i32
    return %arg0, %c0_i32, %c0_i32_0 : i32, i32, i32
  }
}

module attributes {stable_mosaic.version = 11 : i64} {
  func.func @_k2_bn1_conv2(%arg0: i32, %arg1: memref<32x128xbf16, #tpu.memory_space<vmem>>, %arg2: memref<1x128xf32, #tpu.memory_space<vmem>>, %arg3: memref<1x128xf32, #tpu.memory_space<vmem>>, %arg4: memref<384x128xbf16, #tpu.memory_space<vmem>>, %arg5: memref<32x128xbf16, #tpu.memory_space<vmem>>, %arg6: memref<1x2x128xf32, #tpu.memory_space<vmem>>) attributes {dimension_semantics = [#tpu.dimension_semantics<parallel>], iteration_bounds = array<i64: 1>, scalar_prefetch = 0 : i64, scratch_operands = 0 : i64, tpu.core_type = #tpu.core_type<tc>, window_params = [{transform_indices = @transform_0, window_bounds = array<i64: 32, 128>}, {pipeline_mode = #tpu.pipeline_mode<synchronous>, transform_indices = @transform_1, window_bounds = array<i64: 1, 128>}, {pipeline_mode = #tpu.pipeline_mode<synchronous>, transform_indices = @transform_2, window_bounds = array<i64: 1, 128>}, {pipeline_mode = #tpu.pipeline_mode<synchronous>, transform_indices = @transform_3, window_bounds = array<i64: 384, 128>}, {transform_indices = @transform_4, window_bounds = array<i64: 32, 128>}, {transform_indices = @transform_5, window_bounds = array<i64: 1, 2, 128>}]} {
    %c0 = arith.constant 0 : index
    %c0_0 = arith.constant 0 : index
    %0 = vector.load %arg1[%c0, %c0_0] : memref<32x128xbf16, #tpu.memory_space<vmem>>, vector<32x128xbf16>
    %1 = arith.extf %0 : vector<32x128xbf16> to vector<32x128xf32>
    %c0_1 = arith.constant 0 : index
    %c0_2 = arith.constant 0 : index
    %2 = vector.load %arg2[%c0_1, %c0_2] : memref<1x128xf32, #tpu.memory_space<vmem>>, vector<1x128xf32>
    %3 = vector.broadcast %2 : vector<1x128xf32> to vector<32x128xf32>
    %4 = arith.mulf %1, %3 : vector<32x128xf32>
    %c0_3 = arith.constant 0 : index
    %c0_4 = arith.constant 0 : index
    %5 = vector.load %arg3[%c0_3, %c0_4] : memref<1x128xf32, #tpu.memory_space<vmem>>, vector<1x128xf32>
    %6 = vector.broadcast %5 : vector<1x128xf32> to vector<32x128xf32>
    %7 = arith.addf %4, %6 : vector<32x128xf32>
    %cst = arith.constant 0.000000e+00 : f32
    %8 = vector.broadcast %cst : f32 to vector<32x128xf32>
    %9 = arith.maximumf %7, %8 : vector<32x128xf32>
    %10 = tpu.iota {dimensions = array<i32: 0>} : vector<32x128xi32>
    %c16_i32 = arith.constant 16 : i32
    %c0_i32 = arith.constant 0 : i32
    %11 = arith.cmpi eq, %c16_i32, %c0_i32 : i32
    %c1_i32 = arith.constant 1 : i32
    %12 = arith.select %11, %c1_i32, %c16_i32 : i32
    %13 = vector.broadcast %12 : i32 to vector<32x128xi32>
    %14 = arith.remsi %10, %13 : vector<32x128xi32>
    %c0_i32_5 = arith.constant 0 : i32
    %15 = vector.broadcast %c0_i32_5 : i32 to vector<32x128xi32>
    %16 = arith.cmpi ne, %14, %15 : vector<32x128xi32>
    %c0_i32_6 = arith.constant 0 : i32
    %17 = vector.broadcast %c0_i32_6 : i32 to vector<32x128xi32>
    %18 = arith.cmpi slt, %14, %17 : vector<32x128xi32>
    %c0_i32_7 = arith.constant 0 : i32
    %19 = arith.cmpi slt, %12, %c0_i32_7 : i32
    %20 = vector.broadcast %19 : i1 to vector<32x128xi1>
    %21 = vector.broadcast %20 : vector<32x128xi1> to vector<32x128xi1>
    %22 = arith.xori %18, %21 : vector<32x128xi1>
    %23 = arith.andi %22, %16 : vector<32x128xi1>
    %24 = vector.broadcast %12 : i32 to vector<32x128xi32>
    %25 = arith.addi %14, %24 : vector<32x128xi32>
    %26 = arith.select %23, %25, %14 : vector<32x128xi1>, vector<32x128xi32>
    %c1_i32_8 = arith.constant 1 : i32
    %27 = vector.broadcast %c1_i32_8 : i32 to vector<32x128xi32>
    %28 = arith.cmpi sge, %26, %27 : vector<32x128xi32>
    %c1_i32_9 = arith.constant 1 : i32
    %29 = tpu.dynamic_rotate %9 by %c1_i32_9 dim 0 : vector<32x128xf32>, i32 -> vector<32x128xf32>
    %cst_10 = arith.constant 0.000000e+00 : f32
    %30 = vector.broadcast %cst_10 : f32 to vector<32x128xf32>
    %31 = arith.select %28, %29, %30 : vector<32x128xi1>, vector<32x128xf32>
    %c14_i32 = arith.constant 14 : i32
    %32 = vector.broadcast %c14_i32 : i32 to vector<32x128xi32>
    %33 = arith.cmpi sle, %26, %32 : vector<32x128xi32>
    %c31_i32 = arith.constant 31 : i32
    %34 = tpu.dynamic_rotate %9 by %c31_i32 dim 0 : vector<32x128xf32>, i32 -> vector<32x128xf32>
    %cst_11 = arith.constant 0.000000e+00 : f32
    %35 = vector.broadcast %cst_11 : f32 to vector<32x128xf32>
    %36 = arith.select %33, %34, %35 : vector<32x128xi1>, vector<32x128xf32>
    %37 = tpu.concatenate %31, %9, %36 in 1 : vector<32x128xf32>, vector<32x128xf32>, vector<32x128xf32> -> vector<32x384xf32>
    %38 = arith.truncf %37 : vector<32x384xf32> to vector<32x384xbf16>
    %c0_12 = arith.constant 0 : index
    %c0_13 = arith.constant 0 : index
    %39 = vector.load %arg4[%c0_12, %c0_13] : memref<384x128xbf16, #tpu.memory_space<vmem>>, vector<384x128xbf16>
    %cst_14 = arith.constant dense<0.000000e+00> : vector<32x128xf32>
    %40 = tpu.matmul %38, %39, %cst_14 {dimension_numbers = #tpu.dot_dimension_numbers<[1], [0], [0], [1], [0, 0, 1, 1], [], []>} : vector<32x384xbf16>, vector<384x128xbf16>, vector<32x128xf32> -> vector<32x128xf32>
    %41 = arith.truncf %40 : vector<32x128xf32> to vector<32x128xbf16>
    %c0_15 = arith.constant 0 : index
    %c0_16 = arith.constant 0 : index
    %42 = vector.load %arg5[%c0_15, %c0_16] : memref<32x128xbf16, #tpu.memory_space<vmem>>, vector<32x128xbf16>
    tpu.vector_store %arg5[%c0_15, %c0_16], %41 {strides = array<i32>} : memref<32x128xbf16, #tpu.memory_space<vmem>>, vector<32x128xbf16>,
    %cst_17 = arith.constant dense<0.000000e+00> : vector<128xf32>
    %43 = vector.multi_reduction <add>, %40, %cst_17 [0] : vector<32x128xf32> to vector<128xf32>
    %44 = vector.shape_cast %43 : vector<128xf32> to vector<1x128xf32>
    %45 = arith.mulf %40, %40 : vector<32x128xf32>
    %cst_18 = arith.constant dense<0.000000e+00> : vector<128xf32>
    %46 = vector.multi_reduction <add>, %45, %cst_18 [0] : vector<32x128xf32> to vector<128xf32>
    %47 = vector.shape_cast %46 : vector<128xf32> to vector<1x128xf32>
    %48 = tpu.iota {dimensions = array<i32: 0>} : vector<2x128xi32>
    %c0_i32_19 = arith.constant 0 : i32
    %49 = vector.broadcast %c0_i32_19 : i32 to vector<2x128xi32>
    %50 = arith.cmpi eq, %48, %49 : vector<2x128xi32>
    %51 = vector.shape_cast %44 : vector<1x128xf32> to vector<1x128xf32>
    %52 = vector.broadcast %51 : vector<1x128xf32> to vector<2x128xf32>
    %53 = vector.shape_cast %47 : vector<1x128xf32> to vector<1x128xf32>
    %54 = vector.broadcast %53 : vector<1x128xf32> to vector<2x128xf32>
    %55 = arith.select %50, %52, %54 : vector<2x128xi1>, vector<2x128xf32>
    %c0_20 = arith.constant 0 : index
    %c0_21 = arith.constant 0 : index
    %c0_22 = arith.constant 0 : index
    %56 = vector.load %arg6[%c0_20, %c0_21, %c0_22] : memref<1x2x128xf32, #tpu.memory_space<vmem>>, vector<1x2x128xf32>
    %57 = vector.shape_cast %56 : vector<1x2x128xf32> to vector<2x128xf32>
    %58 = vector.shape_cast %55 : vector<2x128xf32> to vector<1x2x128xf32>
    tpu.vector_store %arg6[%c0_20, %c0_21, %c0_22], %58 {strides = array<i32>} : memref<1x2x128xf32, #tpu.memory_space<vmem>>, vector<1x2x128xf32>,
    return
  }
  func.func @transform_0(%arg0: i32) -> (i32, i32) {
    %c0_i32 = arith.constant 0 : i32
    %c0_i32_0 = arith.constant 0 : i32
    return %arg0, %c0_i32 : i32, i32
  }
  func.func @transform_1(%arg0: i32) -> (i32, i32) {
    %c0_i32 = arith.constant 0 : i32
    %c0_i32_0 = arith.constant 0 : i32
    %c0_i32_1 = arith.constant 0 : i32
    return %c0_i32, %c0_i32_0 : i32, i32
  }
  func.func @transform_2(%arg0: i32) -> (i32, i32) {
    %c0_i32 = arith.constant 0 : i32
    %c0_i32_0 = arith.constant 0 : i32
    %c0_i32_1 = arith.constant 0 : i32
    return %c0_i32, %c0_i32_0 : i32, i32
  }
  func.func @transform_3(%arg0: i32) -> (i32, i32) {
    %c0_i32 = arith.constant 0 : i32
    %c0_i32_0 = arith.constant 0 : i32
    %c0_i32_1 = arith.constant 0 : i32
    return %c0_i32, %c0_i32_0 : i32, i32
  }
  func.func @transform_4(%arg0: i32) -> (i32, i32) {
    %c0_i32 = arith.constant 0 : i32
    %c0_i32_0 = arith.constant 0 : i32
    return %arg0, %c0_i32 : i32, i32
  }
  func.func @transform_5(%arg0: i32) -> (i32, i32, i32) {
    %c0_i32 = arith.constant 0 : i32
    %c0_i32_0 = arith.constant 0 : i32
    %c0_i32_1 = arith.constant 0 : i32
    return %arg0, %c0_i32, %c0_i32_0 : i32, i32, i32
  }
}

module attributes {stable_mosaic.version = 11 : i64} {
  func.func @_k3_proj(%arg0: i32, %arg1: memref<32x128xbf16, #tpu.memory_space<vmem>>, %arg2: memref<1x128xf32, #tpu.memory_space<vmem>>, %arg3: memref<1x128xf32, #tpu.memory_space<vmem>>, %arg4: memref<32x128xbf16, #tpu.memory_space<vmem>>, %arg5: memref<1x128xf32, #tpu.memory_space<vmem>>, %arg6: memref<1x128xf32, #tpu.memory_space<vmem>>, %arg7: memref<32x128xf32, #tpu.memory_space<vmem>>) attributes {dimension_semantics = [#tpu.dimension_semantics<parallel>], iteration_bounds = array<i64: 1>, scalar_prefetch = 0 : i64, scratch_operands = 0 : i64, tpu.core_type = #tpu.core_type<tc>, window_params = [{transform_indices = @transform_0, window_bounds = array<i64: 32, 128>}, {pipeline_mode = #tpu.pipeline_mode<synchronous>, transform_indices = @transform_1, window_bounds = array<i64: 1, 128>}, {pipeline_mode = #tpu.pipeline_mode<synchronous>, transform_indices = @transform_2, window_bounds = array<i64: 1, 128>}, {transform_indices = @transform_3, window_bounds = array<i64: 32, 128>}, {pipeline_mode = #tpu.pipeline_mode<synchronous>, transform_indices = @transform_4, window_bounds = array<i64: 1, 128>}, {pipeline_mode = #tpu.pipeline_mode<synchronous>, transform_indices = @transform_5, window_bounds = array<i64: 1, 128>}, {transform_indices = @transform_6, window_bounds = array<i64: 32, 128>}]} {
    %c0 = arith.constant 0 : index
    %c0_0 = arith.constant 0 : index
    %0 = vector.load %arg1[%c0, %c0_0] : memref<32x128xbf16, #tpu.memory_space<vmem>>, vector<32x128xbf16>
    %1 = arith.extf %0 : vector<32x128xbf16> to vector<32x128xf32>
    %c0_1 = arith.constant 0 : index
    %c0_2 = arith.constant 0 : index
    %2 = vector.load %arg2[%c0_1, %c0_2] : memref<1x128xf32, #tpu.memory_space<vmem>>, vector<1x128xf32>
    %3 = vector.broadcast %2 : vector<1x128xf32> to vector<32x128xf32>
    %4 = arith.mulf %1, %3 : vector<32x128xf32>
    %c0_3 = arith.constant 0 : index
    %c0_4 = arith.constant 0 : index
    %5 = vector.load %arg3[%c0_3, %c0_4] : memref<1x128xf32, #tpu.memory_space<vmem>>, vector<1x128xf32>
    %6 = vector.broadcast %5 : vector<1x128xf32> to vector<32x128xf32>
    %7 = arith.addf %4, %6 : vector<32x128xf32>
    %c0_5 = arith.constant 0 : index
    %c0_6 = arith.constant 0 : index
    %8 = vector.load %arg4[%c0_5, %c0_6] : memref<32x128xbf16, #tpu.memory_space<vmem>>, vector<32x128xbf16>
    %9 = arith.extf %8 : vector<32x128xbf16> to vector<32x128xf32>
    %c0_7 = arith.constant 0 : index
    %c0_8 = arith.constant 0 : index
    %10 = vector.load %arg5[%c0_7, %c0_8] : memref<1x128xf32, #tpu.memory_space<vmem>>, vector<1x128xf32>
    %11 = vector.broadcast %10 : vector<1x128xf32> to vector<32x128xf32>
    %12 = arith.mulf %9, %11 : vector<32x128xf32>
    %13 = arith.addf %7, %12 : vector<32x128xf32>
    %c0_9 = arith.constant 0 : index
    %c0_10 = arith.constant 0 : index
    %14 = vector.load %arg6[%c0_9, %c0_10] : memref<1x128xf32, #tpu.memory_space<vmem>>, vector<1x128xf32>
    %15 = vector.broadcast %14 : vector<1x128xf32> to vector<32x128xf32>
    %16 = arith.addf %13, %15 : vector<32x128xf32>
    %cst = arith.constant 0.000000e+00 : f32
    %17 = vector.broadcast %cst : f32 to vector<32x128xf32>
    %18 = arith.maximumf %16, %17 : vector<32x128xf32>
    %c0_11 = arith.constant 0 : index
    %c0_12 = arith.constant 0 : index
    %19 = vector.load %arg7[%c0_11, %c0_12] : memref<32x128xf32, #tpu.memory_space<vmem>>, vector<32x128xf32>
    tpu.vector_store %arg7[%c0_11, %c0_12], %18 {strides = array<i32>} : memref<32x128xf32, #tpu.memory_space<vmem>>, vector<32x128xf32>,
    return
  }
  func.func @transform_0(%arg0: i32) -> (i32, i32) {
    %c0_i32 = arith.constant 0 : i32
    %c0_i32_0 = arith.constant 0 : i32
    return %arg0, %c0_i32 : i32, i32
  }
  func.func @transform_1(%arg0: i32) -> (i32, i32) {
    %c0_i32 = arith.constant 0 : i32
    %c0_i32_0 = arith.constant 0 : i32
    %c0_i32_1 = arith.constant 0 : i32
    return %c0_i32, %c0_i32_0 : i32, i32
  }
  func.func @transform_2(%arg0: i32) -> (i32, i32) {
    %c0_i32 = arith.constant 0 : i32
    %c0_i32_0 = arith.constant 0 : i32
    %c0_i32_1 = arith.constant 0 : i32
    return %c0_i32, %c0_i32_0 : i32, i32
  }
  func.func @transform_3(%arg0: i32) -> (i32, i32) {
    %c0_i32 = arith.constant 0 : i32
    %c0_i32_0 = arith.constant 0 : i32
    return %arg0, %c0_i32 : i32, i32
  }
  func.func @transform_4(%arg0: i32) -> (i32, i32) {
    %c0_i32 = arith.constant 0 : i32
    %c0_i32_0 = arith.constant 0 : i32
    %c0_i32_1 = arith.constant 0 : i32
    return %c0_i32, %c0_i32_0 : i32, i32
  }
  func.func @transform_5(%arg0: i32) -> (i32, i32) {
    %c0_i32 = arith.constant 0 : i32
    %c0_i32_0 = arith.constant 0 : i32
    %c0_i32_1 = arith.constant 0 : i32
    return %c0_i32, %c0_i32_0 : i32, i32
  }
  func.func @transform_6(%arg0: i32) -> (i32, i32) {
    %c0_i32 = arith.constant 0 : i32
    %c0_i32_0 = arith.constant 0 : i32
    return %arg0, %c0_i32 : i32, i32
  }
}

</mosaic_0001>

<llo_original>
// kernel: tile.38
$region0: #{tile.38}
  #allocation0 [shape = 's32[1]{0}', space=sflag, size = 0x4, scoped, tag = 'scoped memory for tile.38']
  %s0 = inlined_call_operand.vmem [shape: f32[8], index: 0, kind: input, shape index: {}]
  %s1 = inlined_call_operand.vmem [shape: f32[16,8], index: 1, kind: output, shape index: {}]
  // Predicated region
  $region2: #{tile.38} parent=0 // pred_check
    _
  $region3: #{tile.38} parent=0 // pred_check_branch
    %3 = sbr.rel (0) target = $region5
  $region4: #{tile.38} parent=0 // pred_region
    _
  $region5: #{tile.38} parent=0 // pred_fallthru
    _
  %v4 = vld [vmem:[%s0] ss:$0 sm:$0xff]
  %5 = vst [vmem:[%s1] sm:$0xff] %v4
  %s6 = scalar_lea.vmem %s1, 8
  %7 = vst [vmem:[%s6] sm:$0xff] %v4

// kernel: tile.39
$region0: #{tile.39}
  %s0 = inlined_call_operand.vmem [shape: f32[16,8], index: 0, kind: input, shape index: {}]
  %s1 = inlined_call_operand.vmem [shape: f32[1,128], index: 1, kind: output, shape index: {}]
  $region1: #{tile.39} parent=0
    #allocation0 [shape = 'u8[4096]{0}', space=vmem, size = 0x1000, scoped, tag = 'scoped mem for output reshape']
    %v2 = vld [vmem:[%s0] sm:$0x1]
    %vm3 = vcmask 64512
    %4 = vst.msk [vmem:[#allocation0] sm:$0x1] %vm3, %v2
    %s5 = scalar_lea.vmem %s0, 15
    %v6 = vld [vmem:[%s5] sm:$0x1]
    %7 = vrot.lane.b32.xlu0 %v6, 120
    %v8 = vpop.permute.xlu0 %7
    %vm9 = vcmask 1048512
    %10 = vst.msk [vmem:[#allocation0] sm:$0x1] %vm9, %v8
    %s11 = scalar_lea.vmem %s0, 14
    %v12 = vld [vmem:[%s11] sm:$0x1]
    %13 = vrot.lane.b32.xlu0 %v12, 112
    %v14 = vpop.permute.xlu0 %13
    %vm15 = vcmask 982912
    %16 = vst.msk [vmem:[#allocation0] sm:$0x1] %vm15, %v14
    %s17 = scalar_lea.vmem %s0, 13
    %v18 = vld [vmem:[%s17] sm:$0x1]
    %19 = vrot.lane.b32.xlu0 %v18, 104
    %v20 = vpop.permute.xlu0 %19
    %vm21 = vcmask 917312
    %22 = vst.msk [vmem:[#allocation0] sm:$0x1] %vm21, %v20
    %s23 = scalar_lea.vmem %s0, 12
    %v24 = vld [vmem:[%s23] sm:$0x1]
    %25 = vrot.lane.b32.xlu0 %v24, 96
    %v26 = vpop.permute.xlu0 %25
    %vm27 = vcmask 851712
    %28 = vst.msk [vmem:[#allocation0] sm:$0x1] %vm27, %v26
    %s29 = scalar_lea.vmem %s0, 11
    %v30 = vld [vmem:[%s29] sm:$0x1]
    %31 = vrot.lane.b32.xlu0 %v30, 88
    %v32 = vpop.permute.xlu0 %31
    %vm33 = vcmask 786112
    %34 = vst.msk [vmem:[#allocation0] sm:$0x1] %vm33, %v32
    %s35 = scalar_lea.vmem %s0, 10
    %v36 = vld [vmem:[%s35] sm:$0x1]
    %37 = vrot.lane.b32.xlu0 %v36, 80
    %v38 = vpop.permute.xlu0 %37
    %vm39 = vcmask 720512
    %40 = vst.msk [vmem:[#allocation0] sm:$0x1] %vm39, %v38
    %s41 = scalar_lea.vmem %s0, 9
    %v42 = vld [vmem:[%s41] sm:$0x1]
    %43 = vrot.lane.b32.xlu0 %v42, 72
    %v44 = vpop.permute.xlu0 %43
    %vm45 = vcmask 654912
    %46 = vst.msk [vmem:[#allocation0] sm:$0x1] %vm45, %v44
    %s47 = scalar_lea.vmem %s0, 8
    %v48 = vld [vmem:[%s47] sm:$0x1]
    %49 = vrot.lane.b32.xlu0 %v48, 64
    %v50 = vpop.permute.xlu0 %49
    %vm51 = vcmask 589312
    %52 = vst.msk [vmem:[#allocation0] sm:$0x1] %vm51, %v50
    %s53 = scalar_lea.vmem %s0, 7
    %v54 = vld [vmem:[%s53] sm:$0x1]
    %55 = vrot.lane.b32.xlu0 %v54, 56
    %v56 = vpop.permute.xlu0 %55
    %vm57 = vcmask 523712
    %58 = vst.msk [vmem:[#allocation0] sm:$0x1] %vm57, %v56
    %s59 = scalar_lea.vmem %s0, 6
    %v60 = vld [vmem:[%s59] sm:$0x1]
    %61 = vrot.lane.b32.xlu0 %v60, 48
    %v62 = vpop.permute.xlu0 %61
    %vm63 = vcmask 458112
    %64 = vst.msk [vmem:[#allocation0] sm:$0x1] %vm63, %v62
    %s65 = scalar_lea.vmem %s0, 5
    %v66 = vld [vmem:[%s65] sm:$0x1]
    %67 = vrot.lane.b32.xlu0 %v66, 40
    %v68 = vpop.permute.xlu0 %67
    %vm69 = vcmask 392512
    %70 = vst.msk [vmem:[#allocation0] sm:$0x1] %vm69, %v68
    %s71 = scalar_lea.vmem %s0, 4
    %v72 = vld [vmem:[%s71] sm:$0x1]
    %73 = vrot.lane.b32.xlu0 %v72, 32
    %v74 = vpop.permute.xlu0 %73
    %vm75 = vcmask 326912
    %76 = vst.msk [vmem:[#allocation0] sm:$0x1] %vm75, %v74
    %s77 = scalar_lea.vmem %s0, 3
    %v78 = vld [vmem:[%s77] sm:$0x1]
    %79 = vrot.lane.b32.xlu0 %v78, 24
    %v80 = vpop.permute.xlu0 %79
    %vm81 = vcmask 261312
    %82 = vst.msk [vmem:[#allocation0] sm:$0x1] %vm81, %v80
    %s83 = scalar_lea.vmem %s0, 2
    %v84 = vld [vmem:[%s83] sm:$0x1]
    %85 = vrot.lane.b32.xlu0 %v84, 16
    %v86 = vpop.permute.xlu0 %85
    %vm87 = vcmask 195712
    %88 = vst.msk [vmem:[#allocation0] sm:$0x1] %vm87, %v86
    %s89 = scalar_lea.vmem %s0, 1
    %v90 = vld [vmem:[%s89] sm:$0x1]
    %91 = vrot.lane.b32.xlu0 %v90, 8
    %v92 = vpop.permute.xlu0 %91
    %vm93 = vcmask 130112
    %94 = vst.msk [vmem:[#allocation0] sm:$0x1] %vm93, %v92
    %s96 = sshll.u32 1, 1
    %s97 = ssub.s32 %s96, 1
    %v99 = vld [vmem:[#allocation0] sm:%s97]
    %s100 = sshll.u32 1, 1
    %s101 = ssub.s32 %s100, 1
    %102 = vst [vmem:[%s1] sm:%s101] %v99

// kernel: basic_block_forward.3
$region0: #{basic_block_forward.3}
  #allocation0 [shape = 'u32[]', space=smem, size = 0x4, offset = 0x4, fixed_abs, tag = 'smem constant byte address 0x4 - core index']
  #allocation1 [shape = 'u32[144,128]{1,0:T(1,128)}', space=vmem, size = 0x12000, scoped, tag = 'internal scratch']
  %s0 = inlined_call_operand.vmem [shape: f32[32,128], index: 0, kind: input, shape index: {}]
  %s1 = inlined_call_operand.vmem [shape: bf16[384,128], index: 1, kind: input, shape index: {}]
  %s2 = inlined_call_operand.vmem [shape: bf16[128,128], index: 2, kind: input, shape index: {}]
  %s3 = inlined_call_operand.vmem [shape: bf16[32,128], index: 3, kind: output, shape index: {0}]
  %s4 = inlined_call_operand.vmem [shape: bf16[32,128], index: 4, kind: output, shape index: {1}]
  %s5 = inlined_call_operand.vmem [shape: f32[1,4,128], index: 5, kind: output, shape index: {2}]
  %6 = xla_tuple %s3, %s4, %s5
  %s7 = sld [smem:[#allocation0]]
  $region38: #{basic_block_forward.3} parent=0
    _
  %s9 = ssub.s32 1, %s7
  %s10 = scalar_select 0, %s9, %s7
  // Predicated region
  $region2: #{basic_block_forward.3} parent=0 // pred_check
    _
  $region3: #{basic_block_forward.3} parent=0 // pred_check_branch
    %12 = sbr.rel (0) target = $region5
  $region4: #{basic_block_forward.3} parent=0 // pred_region
    _
  $region5: #{basic_block_forward.3} parent=0 // pred_fallthru
    _
  // Predicated region
  $region6: #{basic_block_forward.3} parent=0 // pred_check
    _
  $region7: #{basic_block_forward.3} parent=0 // pred_check_branch
    %14 = sbr.rel (0) target = $region9
  $region8: #{basic_block_forward.3} parent=0 // pred_region
    _
  $region9: #{basic_block_forward.3} parent=0 // pred_fallthru
    _
  // Predicated region
  $region10: #{basic_block_forward.3} parent=0 // pred_check
    _
  $region11: #{basic_block_forward.3} parent=0 // pred_check_branch
    %16 = sbr.rel (0) target = $region13
  $region12: #{basic_block_forward.3} parent=0 // pred_region
    _
  $region13: #{basic_block_forward.3} parent=0 // pred_fallthru
    _
  %v18 = vld [vmem:[%s0] sm:$0xff]
  %v19 = vld [vmem:[%s0 + $0x8] sm:$0xff]
  %v20 = vld [vmem:[%s0 + $0x10] sm:$0xff]
  %v21 = vld [vmem:[%s0 + $0x18] sm:$0xff]
  %v22 = vlaneseq
  %v23 = vshrl.u32 %v22, 7
  %v24 = vadd.s32 %v23, 8
  %v25 = vadd.s32 %v23, 16
  %v26 = vadd.s32 %v23, 24
  %vm27 = vcmp.lt.s32.totalorder %v23, 0
  %v28 = vsub.s32 0, %v23
  %v29 = vsel %vm27, %v28, %v23
  %v30 = vshrl.u32 %v29, 4
  %v31 = vand.u32 %v29, 15
  %v32 = vsub.s32 0, %v31
  %v33 = vsel %vm27, %v32, %v31
  %vm34 = vcmp.lt.s32.totalorder %v24, 0
  %v35 = vsub.s32 0, %v24
  %v36 = vsel %vm34, %v35, %v24
  %v37 = vshrl.u32 %v36, 4
  %v38 = vand.u32 %v36, 15
  %v39 = vsub.s32 0, %v38
  %v40 = vsel %vm34, %v39, %v38
  %vm41 = vcmp.lt.s32.totalorder %v25, 0
  %v42 = vsub.s32 0, %v25
  %v43 = vsel %vm41, %v42, %v25
  %v44 = vshrl.u32 %v43, 4
  %v45 = vand.u32 %v43, 15
  %v46 = vsub.s32 0, %v45
  %v47 = vsel %vm41, %v46, %v45
  %vm48 = vcmp.lt.s32.totalorder %v26, 0
  %v49 = vsub.s32 0, %v26
  %v50 = vsel %vm48, %v49, %v26
  %v51 = vshrl.u32 %v50, 4
  %v52 = vand.u32 %v50, 15
  %v53 = vsub.s32 0, %v52
  %v54 = vsel %vm48, %v53, %v52
  %vm55 = vcmp.ne.s32.totalorder %v33, 0
  %vm56 = vcmp.ne.s32.totalorder %v40, 0
  %vm57 = vcmp.ne.s32.totalorder %v47, 0
  %vm58 = vcmp.ne.s32.totalorder %v54, 0
  %vm59 = vcmp.lt.s32.totalorder %v33, 0
  %vm60 = vcmp.lt.s32.totalorder %v40, 0
  %vm61 = vcmp.lt.s32.totalorder %v47, 0
  %vm62 = vcmp.lt.s32.totalorder %v54, 0
  %vm63 = vmand %vm59, %vm55
  %vm64 = vmand %vm60, %vm56
  %vm65 = vmand %vm61, %vm57
  %vm66 = vmand %vm62, %vm58
  %v67 = vadd.s32 %v33, 16
  %v68 = vadd.s32 %v40, 16
  %v69 = vadd.s32 %v47, 16
  %v70 = vadd.s32 %v54, 16
  %v71 = vsel %vm63, %v67, %v33
  %v72 = vsel %vm64, %v68, %v40
  %v73 = vsel %vm65, %v69, %v47
  %v74 = vsel %vm66, %v70, %v54
  %vm75 = vcmp.ge.s32.totalorder %v71, 1
  %vm76 = vcmp.ge.s32.totalorder %v72, 1
  %vm77 = vcmp.ge.s32.totalorder %v73, 1
  %vm78 = vcmp.ge.s32.totalorder %v74, 1
  %v79 = vrot.slane %v18, 7
  %v80 = vrot.slane %v19, 7
  %v81 = vrot.slane %v20, 7
  %v82 = vrot.slane %v21, 7
  %vm83 = vcmp.lt.s32.totalorder %v23, 1
  %v84 = vsel %vm83, %v81, %v82
  %v85 = vsel %vm83, %v80, %v81
  %v86 = vsel %vm83, %v79, %v80
  %v87 = vsel %vm83, %v82, %v79
  %v88 = vsel %vm75, %v87, 0.0
  %v89 = vsel %vm76, %v86, 0.0
  %v90 = vsel %vm77, %v85, 0.0
  %v91 = vsel %vm78, %v84, 0.0
  %vm92 = vcmp.le.s32.totalorder %v71, 14
  %vm93 = vcmp.le.s32.totalorder %v72, 14
  %vm94 = vcmp.le.s32.totalorder %v73, 14
  %vm95 = vcmp.le.s32.totalorder %v74, 14
  %v96 = vrot.slane %v18, 1
  %v97 = vrot.slane %v19, 1
  %v98 = vrot.slane %v20, 1
  %v99 = vrot.slane %v21, 1
  %vm100 = vcmp.lt.s32.totalorder %v23, 7
  %v101 = vsel %vm100, %v98, %v99
  %v102 = vsel %vm100, %v97, %v98
  %v103 = vsel %vm100, %v96, %v97
  %v104 = vsel %vm100, %v99, %v96
  %v105 = vsel %vm92, %v103, 0.0
  %v106 = vsel %vm93, %v102, 0.0
  %v107 = vsel %vm94, %v101, 0.0
  %v108 = vsel %vm95, %v104, 0.0
  %v109 = vpack.c.bf16 %v89, %v88
  %v110 = vpack.c.bf16 %v19, %v18
  %v111 = vpack.c.bf16 %v106, %v105
  %v112 = vpack.c.bf16 %v91, %v90
  %v113 = vpack.c.bf16 %v21, %v20
  %v114 = vpack.c.bf16 %v108, %v107
  %v115 = vld [vmem:[%s1] sm:$0xf]
  %v116 = vld [vmem:[%s1 + $0x4] sm:$0xf]
  %v117 = vld [vmem:[%s1 + $0x8] sm:$0xf]
  %v118 = vld [vmem:[%s1 + $0xc] sm:$0xf]
  %v119 = vld [vmem:[%s1 + $0x10] sm:$0xf]
  %v120 = vld [vmem:[%s1 + $0x14] sm:$0xf]
  %v121 = vld [vmem:[%s1 + $0x18] sm:$0xf]
  %v122 = vld [vmem:[%s1 + $0x1c] sm:$0xf]
  %v123 = vld [vmem:[%s1 + $0x20] sm:$0xf]
  %v124 = vld [vmem:[%s1 + $0x24] sm:$0xf]
  %v125 = vld [vmem:[%s1 + $0x28] sm:$0xf]
  %v126 = vld [vmem:[%s1 + $0x2c] sm:$0xf]
  %v127 = vld [vmem:[%s1 + $0x30] sm:$0xf]
  %v128 = vld [vmem:[%s1 + $0x34] sm:$0xf]
  %v129 = vld [vmem:[%s1 + $0x38] sm:$0xf]
  %v130 = vld [vmem:[%s1 + $0x3c] sm:$0xf]
  %v131 = vld [vmem:[%s1 + $0x40] sm:$0xf]
  %v132 = vld [vmem:[%s1 + $0x44] sm:$0xf]
  %v133 = vld [vmem:[%s1 + $0x48] sm:$0xf]
  %v134 = vld [vmem:[%s1 + $0x4c] sm:$0xf]
  %v135 = vld [vmem:[%s1 + $0x50] sm:$0xf]
  %v136 = vld [vmem:[%s1 + $0x54] sm:$0xf]
  %v137 = vld [vmem:[%s1 + $0x58] sm:$0xf]
  %v138 = vld [vmem:[%s1 + $0x5c] sm:$0xf]
  %v139 = vld [vmem:[%s1 + $0x60] sm:$0xf]
  %v140 = vld [vmem:[%s1 + $0x64] sm:$0xf]
  %v141 = vld [vmem:[%s1 + $0x68] sm:$0xf]
  %v142 = vld [vmem:[%s1 + $0x6c] sm:$0xf]
  %v143 = vld [vmem:[%s1 + $0x70] sm:$0xf]
  %v144 = vld [vmem:[%s1 + $0x74] sm:$0xf]
  %v145 = vld [vmem:[%s1 + $0x78] sm:$0xf]
  %v146 = vld [vmem:[%s1 + $0x7c] sm:$0xf]
  %v147 = vld [vmem:[%s1 + $0x80] sm:$0xf]
  %v148 = vld [vmem:[%s1 + $0x84] sm:$0xf]
  %v149 = vld [vmem:[%s1 + $0x88] sm:$0xf]
  %v150 = vld [vmem:[%s1 + $0x8c] sm:$0xf]
  %v151 = vld [vmem:[%s1 + $0x90] sm:$0xf]
  %v152 = vld [vmem:[%s1 + $0x94] sm:$0xf]
  %v153 = vld [vmem:[%s1 + $0x98] sm:$0xf]
  %v154 = vld [vmem:[%s1 + $0x9c] sm:$0xf]
  %v155 = vld [vmem:[%s1 + $0xa0] sm:$0xf]
  %v156 = vld [vmem:[%s1 + $0xa4] sm:$0xf]
  %v157 = vld [vmem:[%s1 + $0xa8] sm:$0xf]
  %v158 = vld [vmem:[%s1 + $0xac] sm:$0xf]
  %v159 = vld [vmem:[%s1 + $0xb0] sm:$0xf]
  %v160 = vld [vmem:[%s1 + $0xb4] sm:$0xf]
  %v161 = vld [vmem:[%s1 + $0xb8] sm:$0xf]
  %v162 = vld [vmem:[%s1 + $0xbc] sm:$0xf]
  %v211 = vunpack.c.l.b16 %v115
  %v212 = vunpack.c.l.b16 %v116
  %v213 = vunpack.c.l.b16 %v117
  %v214 = vunpack.c.l.b16 %v118
  %v215 = vunpack.c.l.b16 %v119
  %v216 = vunpack.c.l.b16 %v120
  %v217 = vunpack.c.l.b16 %v121
  %v218 = vunpack.c.l.b16 %v122
  %v219 = vunpack.c.l.b16 %v123
  %v220 = vunpack.c.l.b16 %v124
  %v221 = vunpack.c.l.b16 %v125
  %v222 = vunpack.c.l.b16 %v126
  %v223 = vunpack.c.l.b16 %v127
  %v224 = vunpack.c.l.b16 %v128
  %v225 = vunpack.c.l.b16 %v129
  %v226 = vunpack.c.l.b16 %v130
  %v227 = vunpack.c.l.b16 %v131
  %v228 = vunpack.c.l.b16 %v132
  %v229 = vunpack.c.l.b16 %v133
  %v230 = vunpack.c.l.b16 %v134
  %v231 = vunpack.c.l.b16 %v135
  %v232 = vunpack.c.l.b16 %v136
  %v233 = vunpack.c.l.b16 %v137
  %v234 = vunpack.c.l.b16 %v138
  %v235 = vunpack.c.l.b16 %v139
  %v236 = vunpack.c.l.b16 %v140
  %v237 = vunpack.c.l.b16 %v141
  %v238 = vunpack.c.l.b16 %v142
  %v239 = vunpack.c.l.b16 %v143
  %v240 = vunpack.c.l.b16 %v144
  %v241 = vunpack.c.l.b16 %v145
  %v242 = vunpack.c.l.b16 %v146
  %v243 = vunpack.c.l.b16 %v147
  %v244 = vunpack.c.l.b16 %v148
  %v245 = vunpack.c.l.b16 %v149
  %v246 = vunpack.c.l.b16 %v150
  %v247 = vunpack.c.l.b16 %v151
  %v248 = vunpack.c.l.b16 %v152
  %v249 = vunpack.c.l.b16 %v153
  %v250 = vunpack.c.l.b16 %v154
  %v251 = vunpack.c.l.b16 %v155
  %v252 = vunpack.c.l.b16 %v156
  %v253 = vunpack.c.l.b16 %v157
  %v254 = vunpack.c.l.b16 %v158
  %v255 = vunpack.c.l.b16 %v159
  %v256 = vunpack.c.l.b16 %v160
  %v257 = vunpack.c.l.b16 %v161
  %v258 = vunpack.c.l.b16 %v162
  %v259 = vpack.c.b16 %v212, %v211
  %v260 = vpack.c.b16 %v214, %v213
  %v261 = vpack.c.b16 %v216, %v215
  %v262 = vpack.c.b16 %v218, %v217
  %v263 = vpack.c.b16 %v220, %v219
  %v264 = vpack.c.b16 %v222, %v221
  %v265 = vpack.c.b16 %v224, %v223
  %v266 = vpack.c.b16 %v226, %v225
  %v267 = vpack.c.b16 %v228, %v227
  %v268 = vpack.c.b16 %v230, %v229
  %v269 = vpack.c.b16 %v232, %v231
  %v270 = vpack.c.b16 %v234, %v233
  %v271 = vpack.c.b16 %v236, %v235
  %v272 = vpack.c.b16 %v238, %v237
  %v273 = vpack.c.b16 %v240, %v239
  %v274 = vpack.c.b16 %v242, %v241
  %v275 = vpack.c.b16 %v244, %v243
  %v276 = vpack.c.b16 %v246, %v245
  %v277 = vpack.c.b16 %v248, %v247
  %v278 = vpack.c.b16 %v250, %v249
  %v279 = vpack.c.b16 %v252, %v251
  %v280 = vpack.c.b16 %v254, %v253
  %v281 = vpack.c.b16 %v256, %v255
  %v282 = vpack.c.b16 %v258, %v257
  %307 = vmatprep.subr.bf16.mxu0 0
  %308 = vmatpush1.bf16.msra.mxu0 %v266
  %309 = vmatprep.subr.bf16.mxu0 0
  %310 = vmatpush1.bf16.msra.mxu0 %v265
  %311 = vmatprep.subr.bf16.mxu0 0
  %312 = vmatpush1.bf16.msra.mxu0 %v264
  %313 = vmatprep.subr.bf16.mxu0 0
  %314 = vmatpush1.bf16.msra.mxu0 %v263
  %315 = vmatprep.subr.bf16.mxu0 0
  %316 = vmatpush1.bf16.msra.mxu0 %v262
  %317 = vmatprep.subr.bf16.mxu0 0
  %318 = vmatpush1.bf16.msra.mxu0 %v261
  %319 = vmatprep.subr.bf16.mxu0 0
  %320 = vmatpush1.bf16.msra.mxu0 %v260
  %321 = vmatprep.subr.bf16.mxu0 0
  %322 = vmatpush1.bf16.msra.mxu0 %v259
  %323 = vmatprep.subr.bf16.mxu0 0
  %324 = vmatpush2.bf16.msra.mxu0 %v274
  %325 = vmatprep.subr.bf16.mxu0 0
  %326 = vmatpush2.bf16.msra.mxu0 %v273
  %327 = vmatprep.subr.bf16.mxu0 0
  %328 = vmatpush2.bf16.msra.mxu0 %v272
  %329 = vmatprep.subr.bf16.mxu0 0
  %330 = vmatpush2.bf16.msra.mxu0 %v271
  %331 = vmatprep.subr.bf16.mxu0 0
  %332 = vmatpush2.bf16.msra.mxu0 %v270
  %333 = vmatprep.subr.bf16.mxu0 0
  %334 = vmatpush2.bf16.msra.mxu0 %v269
  %335 = vmatprep.subr.bf16.mxu0 0
  %336 = vmatpush2.bf16.msra.mxu0 %v268
  %337 = vmatprep.subr.bf16.mxu0 0
  %338 = vmatpush2.bf16.msra.mxu0 %v267
  %339 = vmatprep.mubr.bf16.mxu0 %v110
  %340 = vmatmul.mubr.bf16.gmra.mxu0 %v109
  %v341 = vpop.f32.mrf.mxu0
  %v342 = vadd.f32 0.0, %v341
  %v343 = vpop.f32.mrf.mxu0
  %v344 = vpop.f32.mrf.mxu0
  %v345 = vadd.f32 0.0, %v344
  %v346 = vpop.f32.mrf.mxu0
  %347 = vmatprep.mubr.bf16.mxu0 %v113
  %348 = vmatmul.mubr.bf16.gmra.mxu0 %v112
  %v349 = vpop.f32.mrf.mxu0
  %v350 = vadd.f32 0.0, %v349
  %v351 = vpop.f32.mrf.mxu0
  %v352 = vpop.f32.mrf.mxu0
  %v353 = vadd.f32 0.0, %v352
  %v354 = vpop.f32.mrf.mxu0
  %355 = vdwg.mxu0
  %356 = vmatprep.subr.bf16.mxu0 0
  %357 = vmatpush1.bf16.msra.mxu0 %v282
  %358 = vmatprep.subr.bf16.mxu0 0
  %359 = vmatpush1.bf16.msra.mxu0 %v281
  %360 = vmatprep.subr.bf16.mxu0 0
  %361 = vmatpush1.bf16.msra.mxu0 %v280
  %362 = vmatprep.subr.bf16.mxu0 0
  %363 = vmatpush1.bf16.msra.mxu0 %v279
  %364 = vmatprep.subr.bf16.mxu0 0
  %365 = vmatpush1.bf16.msra.mxu0 %v278
  %366 = vmatprep.subr.bf16.mxu0 0
  %367 = vmatpush1.bf16.msra.mxu0 %v277
  %368 = vmatprep.subr.bf16.mxu0 0
  %369 = vmatpush1.bf16.msra.mxu0 %v276
  %370 = vmatprep.subr.bf16.mxu0 0
  %371 = vmatpush1.bf16.msra.mxu0 %v275
  %372 = vmatprep.subr.bf16.mxu0 0
  %373 = vmatpush2.bf16.msra.mxu0 0
  %374 = vmatprep.subr.bf16.mxu0 0
  %375 = vmatpush2.bf16.msra.mxu0 0
  %376 = vmatprep.subr.bf16.mxu0 0
  %377 = vmatpush2.bf16.msra.mxu0 0
  %378 = vmatprep.subr.bf16.mxu0 0
  %379 = vmatpush2.bf16.msra.mxu0 0
  %380 = vmatprep.subr.bf16.mxu0 0
  %381 = vmatpush2.bf16.msra.mxu0 0
  %382 = vmatprep.subr.bf16.mxu0 0
  %383 = vmatpush2.bf16.msra.mxu0 0
  %384 = vmatprep.subr.bf16.mxu0 0
  %385 = vmatpush2.bf16.msra.mxu0 0
  %386 = vmatprep.subr.bf16.mxu0 0
  %387 = vmatpush2.bf16.msra.mxu0 0
  %388 = vmatprep.mubr.bf16.mxu0 0
  %389 = vmatmul.mubr.bf16.gmra.mxu0 %v111
  %v390 = vpop.f32.mrf.mxu0
  %v391 = vadd.f32 %v342, %v390
  %v392 = vpop.f32.mrf.mxu0
  %v393 = vpop.f32.mrf.mxu0
  %v394 = vadd.f32 %v345, %v393
  %v395 = vpop.f32.mrf.mxu0
  %396 = vmatprep.mubr.bf16.mxu0 0
  %397 = vmatmul.mubr.bf16.gmra.mxu0 %v114
  %v398 = vpop.f32.mrf.mxu0
  %v399 = vadd.f32 %v350, %v398
  %v400 = vpop.f32.mrf.mxu0
  %v401 = vpop.f32.mrf.mxu0
  %v402 = vadd.f32 %v353, %v401
  %v403 = vpop.f32.mrf.mxu0
  %404 = vdwg.mxu0
  %v405 = vpack.c.bf16 %v394, %v391
  %v406 = vpack.c.bf16 %v402, %v399
  %v409 = vunpack.c.l.b16 %v405
  %v410 = vunpack.c.h.b16 %v405
  %v411 = vunpack.c.l.b16 %v406
  %v412 = vunpack.c.h.b16 %v406
  %v413 = vpack.c.b16 %v409, %v409
  %v414 = vpack.c.b16 %v410, %v410
  %v415 = vpack.c.b16 %v411, %v411
  %v416 = vpack.c.b16 %v412, %v412
  %421 = vst [vmem:[%s3] sm:$0xf] %v413
  %422 = vst [vmem:[%s3 + $0x4] sm:$0xf] %v414
  %423 = vst [vmem:[%s3 + $0x8] sm:$0xf] %v415
  %424 = vst [vmem:[%s3 + $0xc] sm:$0xf] %v416
  %v425 = vld [vmem:[%s2] sm:$0xf]
  %v426 = vld [vmem:[%s2 + $0x4] sm:$0xf]
  %v427 = vld [vmem:[%s2 + $0x8] sm:$0xf]
  %v428 = vld [vmem:[%s2 + $0xc] sm:$0xf]
  %v429 = vld [vmem:[%s2 + $0x10] sm:$0xf]
  %v430 = vld [vmem:[%s2 + $0x14] sm:$0xf]
  %v431 = vld [vmem:[%s2 + $0x18] sm:$0xf]
  %v432 = vld [vmem:[%s2 + $0x1c] sm:$0xf]
  %v433 = vld [vmem:[%s2 + $0x20] sm:$0xf]
  %v434 = vld [vmem:[%s2 + $0x24] sm:$0xf]
  %v435 = vld [vmem:[%s2 + $0x28] sm:$0xf]
  %v436 = vld [vmem:[%s2 + $0x2c] sm:$0xf]
  %v437 = vld [vmem:[%s2 + $0x30] sm:$0xf]
  %v438 = vld [vmem:[%s2 + $0x34] sm:$0xf]
  %v439 = vld [vmem:[%s2 + $0x38] sm:$0xf]
  %v440 = vld [vmem:[%s2 + $0x3c] sm:$0xf]
  %v457 = vunpack.c.l.b16 %v425
  %v458 = vunpack.c.l.b16 %v426
  %v459 = vunpack.c.l.b16 %v427
  %v460 = vunpack.c.l.b16 %v428
  %v461 = vunpack.c.l.b16 %v429
  %v462 = vunpack.c.l.b16 %v430
  %v463 = vunpack.c.l.b16 %v431
  %v464 = vunpack.c.l.b16 %v432
  %v465 = vunpack.c.l.b16 %v433
  %v466 = vunpack.c.l.b16 %v434
  %v467 = vunpack.c.l.b16 %v435
  %v468 = vunpack.c.l.b16 %v436
  %v469 = vunpack.c.l.b16 %v437
  %v470 = vunpack.c.l.b16 %v438
  %v471 = vunpack.c.l.b16 %v439
  %v472 = vunpack.c.l.b16 %v440
  %v473 = vpack.c.b16 %v458, %v457
  %v474 = vpack.c.b16 %v460, %v459
  %v475 = vpack.c.b16 %v462, %v461
  %v476 = vpack.c.b16 %v464, %v463
  %v477 = vpack.c.b16 %v466, %v465
  %v478 = vpack.c.b16 %v468, %v467
  %v479 = vpack.c.b16 %v470, %v469
  %v480 = vpack.c.b16 %v472, %v471
  %489 = vmatprep.subr.bf16.mxu0 0
  %490 = vmatpush1.bf16.msra.mxu0 %v480
  %491 = vmatprep.subr.bf16.mxu0 0
  %492 = vmatpush1.bf16.msra.mxu0 %v479
  %493 = vmatprep.subr.bf16.mxu0 0
  %494 = vmatpush1.bf16.msra.mxu0 %v478
  %495 = vmatprep.subr.bf16.mxu0 0
  %496 = vmatpush1.bf16.msra.mxu0 %v477
  %497 = vmatprep.subr.bf16.mxu0 0
  %498 = vmatpush1.bf16.msra.mxu0 %v476
  %499 = vmatprep.subr.bf16.mxu0 0
  %500 = vmatpush1.bf16.msra.mxu0 %v475
  %501 = vmatprep.subr.bf16.mxu0 0
  %502 = vmatpush1.bf16.msra.mxu0 %v474
  %503 = vmatprep.subr.bf16.mxu0 0
  %504 = vmatpush1.bf16.msra.mxu0 %v473
  %505 = vmatprep.subr.bf16.mxu0 0
  %506 = vmatpush2.bf16.msra.mxu0 0
  %507 = vmatprep.subr.bf16.mxu0 0
  %508 = vmatpush2.bf16.msra.mxu0 0
  %509 = vmatprep.subr.bf16.mxu0 0
  %510 = vmatpush2.bf16.msra.mxu0 0
  %511 = vmatprep.subr.bf16.mxu0 0
  %512 = vmatpush2.bf16.msra.mxu0 0
  %513 = vmatprep.subr.bf16.mxu0 0
  %514 = vmatpush2.bf16.msra.mxu0 0
  %515 = vmatprep.subr.bf16.mxu0 0
  %516 = vmatpush2.bf16.msra.mxu0 0
  %517 = vmatprep.subr.bf16.mxu0 0
  %518 = vmatpush2.bf16.msra.mxu0 0
  %519 = vmatprep.subr.bf16.mxu0 0
  %520 = vmatpush2.bf16.msra.mxu0 0
  %521 = vmatprep.mubr.bf16.mxu0 0
  %522 = vmatmul.mubr.bf16.gmra.mxu0 %v110
  %v523 = vpop.f32.mrf.mxu0
  %v524 = vadd.f32 0.0, %v523
  %v525 = vpop.f32.mrf.mxu0
  %v526 = vpop.f32.mrf.mxu0
  %v527 = vadd.f32 0.0, %v526
  %v528 = vpop.f32.mrf.mxu0
  %529 = vmatprep.mubr.bf16.mxu0 0
  %530 = vmatmul.mubr.bf16.gmra.mxu0 %v113
  %v531 = vpop.f32.mrf.mxu0
  %v532 = vadd.f32 0.0, %v531
  %v533 = vpop.f32.mrf.mxu0
  %v534 = vpop.f32.mrf.mxu0
  %v535 = vadd.f32 0.0, %v534
  %v536 = vpop.f32.mrf.mxu0
  %537 = vdwg.mxu0
  %v538 = vpack.c.bf16 %v527, %v524
  %v539 = vpack.c.bf16 %v535, %v532
  %v542 = vunpack.c.l.b16 %v538
  %v543 = vunpack.c.h.b16 %v538
  %v544 = vunpack.c.l.b16 %v539
  %v545 = vunpack.c.h.b16 %v539
  %v546 = vpack.c.b16 %v542, %v542
  %v547 = vpack.c.b16 %v543, %v543
  %v548 = vpack.c.b16 %v544, %v544
  %v549 = vpack.c.b16 %v545, %v545
  %554 = vst [vmem:[%s4] sm:$0xf] %v546
  %555 = vst [vmem:[%s4 + $0x4] sm:$0xf] %v547
  %556 = vst [vmem:[%s4 + $0x8] sm:$0xf] %v548
  %557 = vst [vmem:[%s4 + $0xc] sm:$0xf] %v549
  %v558 = vadd.f32 %v391, %v394
  %v559 = vadd.f32 %v558, %v399
  %v560 = vadd.f32 %v559, %v402
  %v561 = vrot.slane %v560, 4
  %v562 = vadd.f32 %v560, %v561
  %v563 = vrot.slane %v562, 2
  %v564 = vadd.f32 %v562, %v563
  %v565 = vrot.slane %v564, 1
  %v566 = vadd.f32 %v564, %v565
  %v567 = vmul.f32 %v391, %v391
  %v568 = vmul.f32 %v394, %v394
  %v569 = vmul.f32 %v399, %v399
  %v570 = vmul.f32 %v402, %v402
  %v571 = vadd.f32 %v567, %v568
  %v572 = vadd.f32 %v571, %v569
  %v573 = vadd.f32 %v572, %v570
  %v574 = vrot.slane %v573, 4
  %v575 = vadd.f32 %v573, %v574
  %v576 = vrot.slane %v575, 2
  %v577 = vadd.f32 %v575, %v576
  %v578 = vrot.slane %v577, 1
  %v579 = vadd.f32 %v577, %v578
  %v580 = vadd.f32 %v524, %v527
  %v581 = vadd.f32 %v580, %v532
  %v582 = vadd.f32 %v581, %v535
  %v583 = vrot.slane %v582, 4
  %v584 = vadd.f32 %v582, %v583
  %v585 = vrot.slane %v584, 2
  %v586 = vadd.f32 %v584, %v585
  %v587 = vrot.slane %v586, 1
  %v588 = vadd.f32 %v586, %v587
  %v589 = vmul.f32 %v524, %v524
  %v590 = vmul.f32 %v527, %v527
  %v591 = vmul.f32 %v532, %v532
  %v592 = vmul.f32 %v535, %v535
  %v593 = vadd.f32 %v589, %v590
  %v594 = vadd.f32 %v593, %v591
  %v595 = vadd.f32 %v594, %v592
  %v596 = vrot.slane %v595, 4
  %v597 = vadd.f32 %v595, %v596
  %v598 = vrot.slane %v597, 2
  %v599 = vadd.f32 %v597, %v598
  %v600 = vrot.slane %v599, 1
  %v601 = vadd.f32 %v599, %v600
  %vm602 = vcmp.eq.s32.totalorder %v23, 2
  %v603 = vsel %vm602, %v588, %v601
  %vm604 = vcmp.eq.s32.totalorder %v23, 1
  %v605 = vsel %vm604, %v579, %v603
  %vm606 = vcmp.eq.s32.totalorder %v23, 0
  %v607 = vsel %vm606, %v566, %v605
  %608 = vst [vmem:[%s5] sm:$0xf] %v607
  // Predicated region
  $region14: #{basic_block_forward.3} parent=0 // pred_check
    _
  $region15: #{basic_block_forward.3} parent=0 // pred_check_branch
    %610 = sbr.rel (0) target = $region17
  $region16: #{basic_block_forward.3} parent=0 // pred_region
    _
  $region17: #{basic_block_forward.3} parent=0 // pred_fallthru
    _
  // Predicated region
  $region18: #{basic_block_forward.3} parent=0 // pred_check
    _
  $region19: #{basic_block_forward.3} parent=0 // pred_check_branch
    %612 = sbr.rel (0) target = $region21
  $region20: #{basic_block_forward.3} parent=0 // pred_region
    _
  $region21: #{basic_block_forward.3} parent=0 // pred_fallthru
    _
  // Predicated region
  $region22: #{basic_block_forward.3} parent=0 // pred_check
    _
  $region23: #{basic_block_forward.3} parent=0 // pred_check_branch
    %614 = sbr.rel (0) target = $region25
  $region24: #{basic_block_forward.3} parent=0 // pred_region
    _
  $region25: #{basic_block_forward.3} parent=0 // pred_fallthru
    _
  // Predicated region
  $region26: #{basic_block_forward.3} parent=0 // pred_check
    _
  $region27: #{basic_block_forward.3} parent=0 // pred_check_branch
    %616 = sbr.rel (0) target = $region29
  $region28: #{basic_block_forward.3} parent=0 // pred_region
    _
  $region29: #{basic_block_forward.3} parent=0 // pred_fallthru
    _
  // Predicated region
  $region30: #{basic_block_forward.3} parent=0 // pred_check
    _
  $region31: #{basic_block_forward.3} parent=0 // pred_check_branch
    %618 = sbr.rel (0) target = $region33
  $region32: #{basic_block_forward.3} parent=0 // pred_region
    _
  $region33: #{basic_block_forward.3} parent=0 // pred_fallthru
    _
  // Predicated region
  $region34: #{basic_block_forward.3} parent=0 // pred_check
    _
  $region35: #{basic_block_forward.3} parent=0 // pred_check_branch
    %620 = sbr.rel (0) target = $region37
  $region36: #{basic_block_forward.3} parent=0 // pred_region
    _
  $region37: #{basic_block_forward.3} parent=0 // pred_fallthru
    _

// kernel: basic_block_forward.4
$region0: #{basic_block_forward.4}
  #allocation0 [shape = 'u32[]', space=smem, size = 0x4, offset = 0x4, fixed_abs, tag = 'smem constant byte address 0x4 - core index']
  #allocation1 [shape = 'u32[144,128]{1,0:T(1,128)}', space=vmem, size = 0x12000, scoped, tag = 'internal scratch']
  %s0 = inlined_call_operand.vmem [shape: bf16[32,128], index: 0, kind: input, shape index: {}]
  %s1 = inlined_call_operand.vmem [shape: f32[1,128], index: 1, kind: input, shape index: {}]
  %s2 = inlined_call_operand.vmem [shape: f32[1,128], index: 2, kind: input, shape index: {}]
  %s3 = inlined_call_operand.vmem [shape: bf16[384,128], index: 3, kind: input, shape index: {}]
  %s4 = inlined_call_operand.vmem [shape: bf16[32,128], index: 4, kind: output, shape index: {0}]
  %s5 = inlined_call_operand.vmem [shape: f32[1,2,128], index: 5, kind: output, shape index: {1}]
  %6 = xla_tuple %s4, %s5
  %s7 = sld [smem:[#allocation0]]
  $region34: #{basic_block_forward.4} parent=0
    _
  %s9 = ssub.s32 1, %s7
  %s10 = scalar_select 0, %s9, %s7
  // Predicated region
  $region2: #{basic_block_forward.4} parent=0 // pred_check
    _
  $region3: #{basic_block_forward.4} parent=0 // pred_check_branch
    %12 = sbr.rel (0) target = $region5
  $region4: #{basic_block_forward.4} parent=0 // pred_region
    _
  $region5: #{basic_block_forward.4} parent=0 // pred_fallthru
    _
  // Predicated region
  $region6: #{basic_block_forward.4} parent=0 // pred_check
    _
  $region7: #{basic_block_forward.4} parent=0 // pred_check_branch
    %14 = sbr.rel (0) target = $region9
  $region8: #{basic_block_forward.4} parent=0 // pred_region
    _
  $region9: #{basic_block_forward.4} parent=0 // pred_fallthru
    _
  // Predicated region
  $region10: #{basic_block_forward.4} parent=0 // pred_check
    _
  $region11: #{basic_block_forward.4} parent=0 // pred_check_branch
    %16 = sbr.rel (0) target = $region13
  $region12: #{basic_block_forward.4} parent=0 // pred_region
    _
  $region13: #{basic_block_forward.4} parent=0 // pred_fallthru
    _
  // Predicated region
  $region14: #{basic_block_forward.4} parent=0 // pred_check
    _
  $region15: #{basic_block_forward.4} parent=0 // pred_check_branch
    %18 = sbr.rel (0) target = $region17
  $region16: #{basic_block_forward.4} parent=0 // pred_region
    _
  $region17: #{basic_block_forward.4} parent=0 // pred_fallthru
    _
  %v20 = vld [vmem:[%s0] sm:$0xf]
  %v21 = vld [vmem:[%s0 + $0x4] sm:$0xf]
  %v22 = vld [vmem:[%s0 + $0x8] sm:$0xf]
  %v23 = vld [vmem:[%s0 + $0xc] sm:$0xf]
  %v24 = vunpack.c.l.bf16 %v20
  %v25 = vunpack.c.l.bf16 %v21
  %v26 = vunpack.c.l.bf16 %v22
  %v27 = vunpack.c.l.bf16 %v23
  %v28 = vld [vmem:[%s1] sm:$0x1]
  %v30 = vlaneseq
  %v31 = vshrl.u32 %v30, 7
  %v32 = vsub.s32 0, %v31
  %v33 = vrot.slane %v28, %v32
  %v35 = vmul.f32 %v24, %v33
  %v36 = vmul.f32 %v25, %v33
  %v37 = vmul.f32 %v26, %v33
  %v38 = vmul.f32 %v27, %v33
  %v39 = vld [vmem:[%s2] sm:$0x1]
  %v41 = vlaneseq
  %v42 = vshrl.u32 %v41, 7
  %v43 = vsub.s32 0, %v42
  %v44 = vrot.slane %v39, %v43
  %v46 = vadd.f32 %v35, %v44
  %v47 = vadd.f32 %v36, %v44
  %v48 = vadd.f32 %v37, %v44
  %v49 = vadd.f32 %v38, %v44
  %v50 = vmax.f32 %v46, 0.0
  %v51 = vmax.f32 %v47, 0.0
  %v52 = vmax.f32 %v48, 0.0
  %v53 = vmax.f32 %v49, 0.0
  %v54 = vlaneseq
  %v55 = vshrl.u32 %v54, 7
  %v56 = vadd.s32 %v55, 8
  %v57 = vadd.s32 %v55, 16
  %v58 = vadd.s32 %v55, 24
  %vm59 = vcmp.lt.s32.totalorder %v55, 0
  %v60 = vsub.s32 0, %v55
  %v61 = vsel %vm59, %v60, %v55
  %v62 = vshrl.u32 %v61, 4
  %v63 = vand.u32 %v61, 15
  %v64 = vsub.s32 0, %v63
  %v65 = vsel %vm59, %v64, %v63
  %vm66 = vcmp.lt.s32.totalorder %v56, 0
  %v67 = vsub.s32 0, %v56
  %v68 = vsel %vm66, %v67, %v56
  %v69 = vshrl.u32 %v68, 4
  %v70 = vand.u32 %v68, 15
  %v71 = vsub.s32 0, %v70
  %v72 = vsel %vm66, %v71, %v70
  %vm73 = vcmp.lt.s32.totalorder %v57, 0
  %v74 = vsub.s32 0, %v57
  %v75 = vsel %vm73, %v74, %v57
  %v76 = vshrl.u32 %v75, 4
  %v77 = vand.u32 %v75, 15
  %v78 = vsub.s32 0, %v77
  %v79 = vsel %vm73, %v78, %v77
  %vm80 = vcmp.lt.s32.totalorder %v58, 0
  %v81 = vsub.s32 0, %v58
  %v82 = vsel %vm80, %v81, %v58
  %v83 = vshrl.u32 %v82, 4
  %v84 = vand.u32 %v82, 15
  %v85 = vsub.s32 0, %v84
  %v86 = vsel %vm80, %v85, %v84
  %vm87 = vcmp.ne.s32.totalorder %v65, 0
  %vm88 = vcmp.ne.s32.totalorder %v72, 0
  %vm89 = vcmp.ne.s32.totalorder %v79, 0
  %vm90 = vcmp.ne.s32.totalorder %v86, 0
  %vm91 = vcmp.lt.s32.totalorder %v65, 0
  %vm92 = vcmp.lt.s32.totalorder %v72, 0
  %vm93 = vcmp.lt.s32.totalorder %v79, 0
  %vm94 = vcmp.lt.s32.totalorder %v86, 0
  %vm95 = vmand %vm91, %vm87
  %vm96 = vmand %vm92, %vm88
  %vm97 = vmand %vm93, %vm89
  %vm98 = vmand %vm94, %vm90
  %v99 = vadd.s32 %v65, 16
  %v100 = vadd.s32 %v72, 16
  %v101 = vadd.s32 %v79, 16
  %v102 = vadd.s32 %v86, 16
  %v103 = vsel %vm95, %v99, %v65
  %v104 = vsel %vm96, %v100, %v72
  %v105 = vsel %vm97, %v101, %v79
  %v106 = vsel %vm98, %v102, %v86
  %vm107 = vcmp.ge.s32.totalorder %v103, 1
  %vm108 = vcmp.ge.s32.totalorder %v104, 1
  %vm109 = vcmp.ge.s32.totalorder %v105, 1
  %vm110 = vcmp.ge.s32.totalorder %v106, 1
  %v111 = vrot.slane %v50, 7
  %v112 = vrot.slane %v51, 7
  %v113 = vrot.slane %v52, 7
  %v114 = vrot.slane %v53, 7
  %vm115 = vcmp.lt.s32.totalorder %v55, 1
  %v116 = vsel %vm115, %v113, %v114
  %v117 = vsel %vm115, %v112, %v113
  %v118 = vsel %vm115, %v111, %v112
  %v119 = vsel %vm115, %v114, %v111
  %v120 = vsel %vm107, %v119, 0.0
  %v121 = vsel %vm108, %v118, 0.0
  %v122 = vsel %vm109, %v117, 0.0
  %v123 = vsel %vm110, %v116, 0.0
  %vm124 = vcmp.le.s32.totalorder %v103, 14
  %vm125 = vcmp.le.s32.totalorder %v104, 14
  %vm126 = vcmp.le.s32.totalorder %v105, 14
  %vm127 = vcmp.le.s32.totalorder %v106, 14
  %v128 = vrot.slane %v50, 1
  %v129 = vrot.slane %v51, 1
  %v130 = vrot.slane %v52, 1
  %v131 = vrot.slane %v53, 1
  %vm132 = vcmp.lt.s32.totalorder %v55, 7
  %v133 = vsel %vm132, %v130, %v131
  %v134 = vsel %vm132, %v129, %v130
  %v135 = vsel %vm132, %v128, %v129
  %v136 = vsel %vm132, %v131, %v128
  %v137 = vsel %vm124, %v135, 0.0
  %v138 = vsel %vm125, %v134, 0.0
  %v139 = vsel %vm126, %v133, 0.0
  %v140 = vsel %vm127, %v136, 0.0
  %v141 = vpack.c.bf16 %v121, %v120
  %v142 = vpack.c.bf16 %v51, %v50
  %v143 = vpack.c.bf16 %v138, %v137
  %v144 = vpack.c.bf16 %v123, %v122
  %v145 = vpack.c.bf16 %v53, %v52
  %v146 = vpack.c.bf16 %v140, %v139
  %v147 = vld [vmem:[%s3] sm:$0xf]
  %v148 = vld [vmem:[%s3 + $0x4] sm:$0xf]
  %v149 = vld [vmem:[%s3 + $0x8] sm:$0xf]
  %v150 = vld [vmem:[%s3 + $0xc] sm:$0xf]
  %v151 = vld [vmem:[%s3 + $0x10] sm:$0xf]
  %v152 = vld [vmem:[%s3 + $0x14] sm:$0xf]
  %v153 = vld [vmem:[%s3 + $0x18] sm:$0xf]
  %v154 = vld [vmem:[%s3 + $0x1c] sm:$0xf]
  %v155 = vld [vmem:[%s3 + $0x20] sm:$0xf]
  %v156 = vld [vmem:[%s3 + $0x24] sm:$0xf]
  %v157 = vld [vmem:[%s3 + $0x28] sm:$0xf]
  %v158 = vld [vmem:[%s3 + $0x2c] sm:$0xf]
  %v159 = vld [vmem:[%s3 + $0x30] sm:$0xf]
  %v160 = vld [vmem:[%s3 + $0x34] sm:$0xf]
  %v161 = vld [vmem:[%s3 + $0x38] sm:$0xf]
  %v162 = vld [vmem:[%s3 + $0x3c] sm:$0xf]
  %v163 = vld [vmem:[%s3 + $0x40] sm:$0xf]
  %v164 = vld [vmem:[%s3 + $0x44] sm:$0xf]
  %v165 = vld [vmem:[%s3 + $0x48] sm:$0xf]
  %v166 = vld [vmem:[%s3 + $0x4c] sm:$0xf]
  %v167 = vld [vmem:[%s3 + $0x50] sm:$0xf]
  %v168 = vld [vmem:[%s3 + $0x54] sm:$0xf]
  %v169 = vld [vmem:[%s3 + $0x58] sm:$0xf]
  %v170 = vld [vmem:[%s3 + $0x5c] sm:$0xf]
  %v171 = vld [vmem:[%s3 + $0x60] sm:$0xf]
  %v172 = vld [vmem:[%s3 + $0x64] sm:$0xf]
  %v173 = vld [vmem:[%s3 + $0x68] sm:$0xf]
  %v174 = vld [vmem:[%s3 + $0x6c] sm:$0xf]
  %v175 = vld [vmem:[%s3 + $0x70] sm:$0xf]
  %v176 = vld [vmem:[%s3 + $0x74] sm:$0xf]
  %v177 = vld [vmem:[%s3 + $0x78] sm:$0xf]
  %v178 = vld [vmem:[%s3 + $0x7c] sm:$0xf]
  %v179 = vld [vmem:[%s3 + $0x80] sm:$0xf]
  %v180 = vld [vmem:[%s3 + $0x84] sm:$0xf]
  %v181 = vld [vmem:[%s3 + $0x88] sm:$0xf]
  %v182 = vld [vmem:[%s3 + $0x8c] sm:$0xf]
  %v183 = vld [vmem:[%s3 + $0x90] sm:$0xf]
  %v184 = vld [vmem:[%s3 + $0x94] sm:$0xf]
  %v185 = vld [vmem:[%s3 + $0x98] sm:$0xf]
  %v186 = vld [vmem:[%s3 + $0x9c] sm:$0xf]
  %v187 = vld [vmem:[%s3 + $0xa0] sm:$0xf]
  %v188 = vld [vmem:[%s3 + $0xa4] sm:$0xf]
  %v189 = vld [vmem:[%s3 + $0xa8] sm:$0xf]
  %v190 = vld [vmem:[%s3 + $0xac] sm:$0xf]
  %v191 = vld [vmem:[%s3 + $0xb0] sm:$0xf]
  %v192 = vld [vmem:[%s3 + $0xb4] sm:$0xf]
  %v193 = vld [vmem:[%s3 + $0xb8] sm:$0xf]
  %v194 = vld [vmem:[%s3 + $0xbc] sm:$0xf]
  %v243 = vunpack.c.l.b16 %v147
  %v244 = vunpack.c.l.b16 %v148
  %v245 = vunpack.c.l.b16 %v149
  %v246 = vunpack.c.l.b16 %v150
  %v247 = vunpack.c.l.b16 %v151
  %v248 = vunpack.c.l.b16 %v152
  %v249 = vunpack.c.l.b16 %v153
  %v250 = vunpack.c.l.b16 %v154
  %v251 = vunpack.c.l.b16 %v155
  %v252 = vunpack.c.l.b16 %v156
  %v253 = vunpack.c.l.b16 %v157
  %v254 = vunpack.c.l.b16 %v158
  %v255 = vunpack.c.l.b16 %v159
  %v256 = vunpack.c.l.b16 %v160
  %v257 = vunpack.c.l.b16 %v161
  %v258 = vunpack.c.l.b16 %v162
  %v259 = vunpack.c.l.b16 %v163
  %v260 = vunpack.c.l.b16 %v164
  %v261 = vunpack.c.l.b16 %v165
  %v262 = vunpack.c.l.b16 %v166
  %v263 = vunpack.c.l.b16 %v167
  %v264 = vunpack.c.l.b16 %v168
  %v265 = vunpack.c.l.b16 %v169
  %v266 = vunpack.c.l.b16 %v170
  %v267 = vunpack.c.l.b16 %v171
  %v268 = vunpack.c.l.b16 %v172
  %v269 = vunpack.c.l.b16 %v173
  %v270 = vunpack.c.l.b16 %v174
  %v271 = vunpack.c.l.b16 %v175
  %v272 = vunpack.c.l.b16 %v176
  %v273 = vunpack.c.l.b16 %v177
  %v274 = vunpack.c.l.b16 %v178
  %v275 = vunpack.c.l.b16 %v179
  %v276 = vunpack.c.l.b16 %v180
  %v277 = vunpack.c.l.b16 %v181
  %v278 = vunpack.c.l.b16 %v182
  %v279 = vunpack.c.l.b16 %v183
  %v280 = vunpack.c.l.b16 %v184
  %v281 = vunpack.c.l.b16 %v185
  %v282 = vunpack.c.l.b16 %v186
  %v283 = vunpack.c.l.b16 %v187
  %v284 = vunpack.c.l.b16 %v188
  %v285 = vunpack.c.l.b16 %v189
  %v286 = vunpack.c.l.b16 %v190
  %v287 = vunpack.c.l.b16 %v191
  %v288 = vunpack.c.l.b16 %v192
  %v289 = vunpack.c.l.b16 %v193
  %v290 = vunpack.c.l.b16 %v194
  %v291 = vpack.c.b16 %v244, %v243
  %v292 = vpack.c.b16 %v246, %v245
  %v293 = vpack.c.b16 %v248, %v247
  %v294 = vpack.c.b16 %v250, %v249
  %v295 = vpack.c.b16 %v252, %v251
  %v296 = vpack.c.b16 %v254, %v253
  %v297 = vpack.c.b16 %v256, %v255
  %v298 = vpack.c.b16 %v258, %v257
  %v299 = vpack.c.b16 %v260, %v259
  %v300 = vpack.c.b16 %v262, %v261
  %v301 = vpack.c.b16 %v264, %v263
  %v302 = vpack.c.b16 %v266, %v265
  %v303 = vpack.c.b16 %v268, %v267
  %v304 = vpack.c.b16 %v270, %v269
  %v305 = vpack.c.b16 %v272, %v271
  %v306 = vpack.c.b16 %v274, %v273
  %v307 = vpack.c.b16 %v276, %v275
  %v308 = vpack.c.b16 %v278, %v277
  %v309 = vpack.c.b16 %v280, %v279
  %v310 = vpack.c.b16 %v282, %v281
  %v311 = vpack.c.b16 %v284, %v283
  %v312 = vpack.c.b16 %v286, %v285
  %v313 = vpack.c.b16 %v288, %v287
  %v314 = vpack.c.b16 %v290, %v289
  %339 = vmatprep.subr.bf16.mxu0 0
  %340 = vmatpush1.bf16.msra.mxu0 %v298
  %341 = vmatprep.subr.bf16.mxu0 0
  %342 = vmatpush1.bf16.msra.mxu0 %v297
  %343 = vmatprep.subr.bf16.mxu0 0
  %344 = vmatpush1.bf16.msra.mxu0 %v296
  %345 = vmatprep.subr.bf16.mxu0 0
  %346 = vmatpush1.bf16.msra.mxu0 %v295
  %347 = vmatprep.subr.bf16.mxu0 0
  %348 = vmatpush1.bf16.msra.mxu0 %v294
  %349 = vmatprep.subr.bf16.mxu0 0
  %350 = vmatpush1.bf16.msra.mxu0 %v293
  %351 = vmatprep.subr.bf16.mxu0 0
  %352 = vmatpush1.bf16.msra.mxu0 %v292
  %353 = vmatprep.subr.bf16.mxu0 0
  %354 = vmatpush1.bf16.msra.mxu0 %v291
  %355 = vmatprep.subr.bf16.mxu0 0
  %356 = vmatpush2.bf16.msra.mxu0 %v306
  %357 = vmatprep.subr.bf16.mxu0 0
  %358 = vmatpush2.bf16.msra.mxu0 %v305
  %359 = vmatprep.subr.bf16.mxu0 0
  %360 = vmatpush2.bf16.msra.mxu0 %v304
  %361 = vmatprep.subr.bf16.mxu0 0
  %362 = vmatpush2.bf16.msra.mxu0 %v303
  %363 = vmatprep.subr.bf16.mxu0 0
  %364 = vmatpush2.bf16.msra.mxu0 %v302
  %365 = vmatprep.subr.bf16.mxu0 0
  %366 = vmatpush2.bf16.msra.mxu0 %v301
  %367 = vmatprep.subr.bf16.mxu0 0
  %368 = vmatpush2.bf16.msra.mxu0 %v300
  %369 = vmatprep.subr.bf16.mxu0 0
  %370 = vmatpush2.bf16.msra.mxu0 %v299
  %371 = vmatprep.mubr.bf16.mxu0 %v142
  %372 = vmatmul.mubr.bf16.gmra.mxu0 %v141
  %v373 = vpop.f32.mrf.mxu0
  %v374 = vadd.f32 0.0, %v373
  %v375 = vpop.f32.mrf.mxu0
  %v376 = vpop.f32.mrf.mxu0
  %v377 = vadd.f32 0.0, %v376
  %v378 = vpop.f32.mrf.mxu0
  %379 = vmatprep.mubr.bf16.mxu0 %v145
  %380 = vmatmul.mubr.bf16.gmra.mxu0 %v144
  %v381 = vpop.f32.mrf.mxu0
  %v382 = vadd.f32 0.0, %v381
  %v383 = vpop.f32.mrf.mxu0
  %v384 = vpop.f32.mrf.mxu0
  %v385 = vadd.f32 0.0, %v384
  %v386 = vpop.f32.mrf.mxu0
  %387 = vdwg.mxu0
  %388 = vmatprep.subr.bf16.mxu0 0
  %389 = vmatpush1.bf16.msra.mxu0 %v314
  %390 = vmatprep.subr.bf16.mxu0 0
  %391 = vmatpush1.bf16.msra.mxu0 %v313
  %392 = vmatprep.subr.bf16.mxu0 0
  %393 = vmatpush1.bf16.msra.mxu0 %v312
  %394 = vmatprep.subr.bf16.mxu0 0
  %395 = vmatpush1.bf16.msra.mxu0 %v311
  %396 = vmatprep.subr.bf16.mxu0 0
  %397 = vmatpush1.bf16.msra.mxu0 %v310
  %398 = vmatprep.subr.bf16.mxu0 0
  %399 = vmatpush1.bf16.msra.mxu0 %v309
  %400 = vmatprep.subr.bf16.mxu0 0
  %401 = vmatpush1.bf16.msra.mxu0 %v308
  %402 = vmatprep.subr.bf16.mxu0 0
  %403 = vmatpush1.bf16.msra.mxu0 %v307
  %404 = vmatprep.subr.bf16.mxu0 0
  %405 = vmatpush2.bf16.msra.mxu0 0
  %406 = vmatprep.subr.bf16.mxu0 0
  %407 = vmatpush2.bf16.msra.mxu0 0
  %408 = vmatprep.subr.bf16.mxu0 0
  %409 = vmatpush2.bf16.msra.mxu0 0
  %410 = vmatprep.subr.bf16.mxu0 0
  %411 = vmatpush2.bf16.msra.mxu0 0
  %412 = vmatprep.subr.bf16.mxu0 0
  %413 = vmatpush2.bf16.msra.mxu0 0
  %414 = vmatprep.subr.bf16.mxu0 0
  %415 = vmatpush2.bf16.msra.mxu0 0
  %416 = vmatprep.subr.bf16.mxu0 0
  %417 = vmatpush2.bf16.msra.mxu0 0
  %418 = vmatprep.subr.bf16.mxu0 0
  %419 = vmatpush2.bf16.msra.mxu0 0
  %420 = vmatprep.mubr.bf16.mxu0 0
  %421 = vmatmul.mubr.bf16.gmra.mxu0 %v143
  %v422 = vpop.f32.mrf.mxu0
  %v423 = vadd.f32 %v374, %v422
  %v424 = vpop.f32.mrf.mxu0
  %v425 = vpop.f32.mrf.mxu0
  %v426 = vadd.f32 %v377, %v425
  %v427 = vpop.f32.mrf.mxu0
  %428 = vmatprep.mubr.bf16.mxu0 0
  %429 = vmatmul.mubr.bf16.gmra.mxu0 %v146
  %v430 = vpop.f32.mrf.mxu0
  %v431 = vadd.f32 %v382, %v430
  %v432 = vpop.f32.mrf.mxu0
  %v433 = vpop.f32.mrf.mxu0
  %v434 = vadd.f32 %v385, %v433
  %v435 = vpop.f32.mrf.mxu0
  %436 = vdwg.mxu0
  %v437 = vpack.c.bf16 %v426, %v423
  %v438 = vpack.c.bf16 %v434, %v431
  %v441 = vunpack.c.l.b16 %v437
  %v442 = vunpack.c.h.b16 %v437
  %v443 = vunpack.c.l.b16 %v438
  %v444 = vunpack.c.h.b16 %v438
  %v445 = vpack.c.b16 %v441, %v441
  %v446 = vpack.c.b16 %v442, %v442
  %v447 = vpack.c.b16 %v443, %v443
  %v448 = vpack.c.b16 %v444, %v444
  %453 = vst [vmem:[%s4] sm:$0xf] %v445
  %454 = vst [vmem:[%s4 + $0x4] sm:$0xf] %v446
  %455 = vst [vmem:[%s4 + $0x8] sm:$0xf] %v447
  %456 = vst [vmem:[%s4 + $0xc] sm:$0xf] %v448
  %v457 = vadd.f32 %v423, %v426
  %v458 = vadd.f32 %v457, %v431
  %v459 = vadd.f32 %v458, %v434
  %v460 = vrot.slane %v459, 4
  %v461 = vadd.f32 %v459, %v460
  %v462 = vrot.slane %v461, 2
  %v463 = vadd.f32 %v461, %v462
  %v464 = vrot.slane %v463, 1
  %v465 = vadd.f32 %v463, %v464
  %v466 = vmul.f32 %v423, %v423
  %v467 = vmul.f32 %v426, %v426
  %v468 = vmul.f32 %v431, %v431
  %v469 = vmul.f32 %v434, %v434
  %v470 = vadd.f32 %v466, %v467
  %v471 = vadd.f32 %v470, %v468
  %v472 = vadd.f32 %v471, %v469
  %v473 = vrot.slane %v472, 4
  %v474 = vadd.f32 %v472, %v473
  %v475 = vrot.slane %v474, 2
  %v476 = vadd.f32 %v474, %v475
  %v477 = vrot.slane %v476, 1
  %v478 = vadd.f32 %v476, %v477
  %vm479 = vcmp.eq.s32.totalorder %v55, 0
  %v480 = vsel %vm479, %v465, %v478
  %481 = vst [vmem:[%s5] sm:$0x3] %v480
  // Predicated region
  $region18: #{basic_block_forward.4} parent=0 // pred_check
    _
  $region19: #{basic_block_forward.4} parent=0 // pred_check_branch
    %483 = sbr.rel (0) target = $region21
  $region20: #{basic_block_forward.4} parent=0 // pred_region
    _
  $region21: #{basic_block_forward.4} parent=0 // pred_fallthru
    _
  // Predicated region
  $region22: #{basic_block_forward.4} parent=0 // pred_check
    _
  $region23: #{basic_block_forward.4} parent=0 // pred_check_branch
    %485 = sbr.rel (0) target = $region25
  $region24: #{basic_block_forward.4} parent=0 // pred_region
    _
  $region25: #{basic_block_forward.4} parent=0 // pred_fallthru
    _
  // Predicated region
  $region26: #{basic_block_forward.4} parent=0 // pred_check
    _
  $region27: #{basic_block_forward.4} parent=0 // pred_check_branch
    %487 = sbr.rel (0) target = $region29
  $region28: #{basic_block_forward.4} parent=0 // pred_region
    _
  $region29: #{basic_block_forward.4} parent=0 // pred_fallthru
    _
  // Predicated region
  $region30: #{basic_block_forward.4} parent=0 // pred_check
    _
  $region31: #{basic_block_forward.4} parent=0 // pred_check_branch
    %489 = sbr.rel (0) target = $region33
  $region32: #{basic_block_forward.4} parent=0 // pred_region
    _
  $region33: #{basic_block_forward.4} parent=0 // pred_fallthru
    _

// kernel: basic_block_forward.5
$region0: #{basic_block_forward.5}
  #allocation0 [shape = 'u32[]', space=smem, size = 0x4, offset = 0x4, fixed_abs, tag = 'smem constant byte address 0x4 - core index']
  #allocation1 [shape = 'u32[144,128]{1,0:T(1,128)}', space=vmem, size = 0x12000, scoped, tag = 'internal scratch']
  %s0 = inlined_call_operand.vmem [shape: bf16[32,128], index: 0, kind: input, shape index: {}]
  %s1 = inlined_call_operand.vmem [shape: f32[1,128], index: 1, kind: input, shape index: {}]
  %s2 = inlined_call_operand.vmem [shape: f32[1,128], index: 2, kind: input, shape index: {}]
  %s3 = inlined_call_operand.vmem [shape: bf16[32,128], index: 3, kind: input, shape index: {}]
  %s4 = inlined_call_operand.vmem [shape: f32[1,128], index: 4, kind: input, shape index: {}]
  %s5 = inlined_call_operand.vmem [shape: f32[1,128], index: 5, kind: input, shape index: {}]
  %s6 = inlined_call_operand.vmem [shape: f32[32,128], index: 6, kind: output, shape index: {}]
  %s7 = sld [smem:[#allocation0]]
  $region34: #{basic_block_forward.5} parent=0
    _
  %s9 = ssub.s32 1, %s7
  %s10 = scalar_select 0, %s9, %s7
  // Predicated region
  $region2: #{basic_block_forward.5} parent=0 // pred_check
    _
  $region3: #{basic_block_forward.5} parent=0 // pred_check_branch
    %12 = sbr.rel (0) target = $region5
  $region4: #{basic_block_forward.5} parent=0 // pred_region
    _
  $region5: #{basic_block_forward.5} parent=0 // pred_fallthru
    _
  // Predicated region
  $region6: #{basic_block_forward.5} parent=0 // pred_check
    _
  $region7: #{basic_block_forward.5} parent=0 // pred_check_branch
    %14 = sbr.rel (0) target = $region9
  $region8: #{basic_block_forward.5} parent=0 // pred_region
    _
  $region9: #{basic_block_forward.5} parent=0 // pred_fallthru
    _
  // Predicated region
  $region10: #{basic_block_forward.5} parent=0 // pred_check
    _
  $region11: #{basic_block_forward.5} parent=0 // pred_check_branch
    %16 = sbr.rel (0) target = $region13
  $region12: #{basic_block_forward.5} parent=0 // pred_region
    _
  $region13: #{basic_block_forward.5} parent=0 // pred_fallthru
    _
  // Predicated region
  $region14: #{basic_block_forward.5} parent=0 // pred_check
    _
  $region15: #{basic_block_forward.5} parent=0 // pred_check_branch
    %18 = sbr.rel (0) target = $region17
  $region16: #{basic_block_forward.5} parent=0 // pred_region
    _
  $region17: #{basic_block_forward.5} parent=0 // pred_fallthru
    _
  // Predicated region
  $region18: #{basic_block_forward.5} parent=0 // pred_check
    _
  $region19: #{basic_block_forward.5} parent=0 // pred_check_branch
    %20 = sbr.rel (0) target = $region21
  $region20: #{basic_block_forward.5} parent=0 // pred_region
    _
  $region21: #{basic_block_forward.5} parent=0 // pred_fallthru
    _
  // Predicated region
  $region22: #{basic_block_forward.5} parent=0 // pred_check
    _
  $region23: #{basic_block_forward.5} parent=0 // pred_check_branch
    %22 = sbr.rel (0) target = $region25
  $region24: #{basic_block_forward.5} parent=0 // pred_region
    _
  $region25: #{basic_block_forward.5} parent=0 // pred_fallthru
    _
  %v23 = vld [vmem:[%s0] sm:$0xf]
  %v24 = vld [vmem:[%s0 + $0x4] sm:$0xf]
  %v25 = vld [vmem:[%s0 + $0x8] sm:$0xf]
  %v26 = vld [vmem:[%s0 + $0xc] sm:$0xf]
  %v27 = vunpack.c.l.bf16 %v23
  %v28 = vunpack.c.l.bf16 %v24
  %v29 = vunpack.c.l.bf16 %v25
  %v30 = vunpack.c.l.bf16 %v26
  %v31 = vld [vmem:[%s1] sm:$0x1]
  %v33 = vlaneseq
  %v34 = vshrl.u32 %v33, 7
  %v35 = vsub.s32 0, %v34
  %v36 = vrot.slane %v31, %v35
  %v38 = vmul.f32 %v27, %v36
  %v39 = vmul.f32 %v28, %v36
  %v40 = vmul.f32 %v29, %v36
  %v41 = vmul.f32 %v30, %v36
  %v42 = vld [vmem:[%s2] sm:$0x1]
  %v44 = vlaneseq
  %v45 = vshrl.u32 %v44, 7
  %v46 = vsub.s32 0, %v45
  %v47 = vrot.slane %v42, %v46
  %v49 = vadd.f32 %v38, %v47
  %v50 = vadd.f32 %v39, %v47
  %v51 = vadd.f32 %v40, %v47
  %v52 = vadd.f32 %v41, %v47
  %v53 = vld [vmem:[%s3] sm:$0xf]
  %v54 = vld [vmem:[%s3 + $0x4] sm:$0xf]
  %v55 = vld [vmem:[%s3 + $0x8] sm:$0xf]
  %v56 = vld [vmem:[%s3 + $0xc] sm:$0xf]
  %v57 = vunpack.c.l.bf16 %v53
  %v58 = vunpack.c.l.bf16 %v54
  %v59 = vunpack.c.l.bf16 %v55
  %v60 = vunpack.c.l.bf16 %v56
  %v61 = vld [vmem:[%s4] sm:$0x1]
  %v63 = vlaneseq
  %v64 = vshrl.u32 %v63, 7
  %v65 = vsub.s32 0, %v64
  %v66 = vrot.slane %v61, %v65
  %v68 = vmul.f32 %v57, %v66
  %v69 = vmul.f32 %v58, %v66
  %v70 = vmul.f32 %v59, %v66
  %v71 = vmul.f32 %v60, %v66
  %v72 = vadd.f32 %v49, %v68
  %v73 = vadd.f32 %v50, %v69
  %v74 = vadd.f32 %v51, %v70
  %v75 = vadd.f32 %v52, %v71
  %v76 = vld [vmem:[%s5] sm:$0x1]
  %v78 = vlaneseq
  %v79 = vshrl.u32 %v78, 7
  %v80 = vsub.s32 0, %v79
  %v81 = vrot.slane %v76, %v80
  %v83 = vadd.f32 %v72, %v81
  %v84 = vadd.f32 %v73, %v81
  %v85 = vadd.f32 %v74, %v81
  %v86 = vadd.f32 %v75, %v81
  %v87 = vmax.f32 %v83, 0.0
  %v88 = vmax.f32 %v84, 0.0
  %v89 = vmax.f32 %v85, 0.0
  %v90 = vmax.f32 %v86, 0.0
  %91 = vst [vmem:[%s6] sm:$0xff] %v87
  %92 = vst [vmem:[%s6 + $0x8] sm:$0xff] %v88
  %93 = vst [vmem:[%s6 + $0x10] sm:$0xff] %v89
  %94 = vst [vmem:[%s6 + $0x18] sm:$0xff] %v90
  // Predicated region
  $region26: #{basic_block_forward.5} parent=0 // pred_check
    _
  $region27: #{basic_block_forward.5} parent=0 // pred_check_branch
    %96 = sbr.rel (0) target = $region29
  $region28: #{basic_block_forward.5} parent=0 // pred_region
    _
  $region29: #{basic_block_forward.5} parent=0 // pred_fallthru
    _
  // Predicated region
  $region30: #{basic_block_forward.5} parent=0 // pred_check
    _
  $region31: #{basic_block_forward.5} parent=0 // pred_check_branch
    %98 = sbr.rel (0) target = $region33
  $region32: #{basic_block_forward.5} parent=0 // pred_region
    _
  $region33: #{basic_block_forward.5} parent=0 // pred_fallthru
    _

</llo_original>
